<compile_context>
chip_gen: v7x
topology: tpu7x:2x2x1
jax: 0.10.0
libtpu: 0.0.40
codegen_flags: <defaults>
</compile_context>

<pallas_src>
import jax
import jax.numpy as jnp
from jax import lax
from jax.experimental import pallas as pl
from jax.experimental.pallas import tpu as pltpu


def _round_up(x, m):
    return ((x + m - 1) // m) * m


# ----------------------------------------------------------------------------
# Fused Pallas kernel (all LSTM layers + FC head, single invocation)
# ----------------------------------------------------------------------------
def make_rnn_kernel(n_layers, T, Bp, H, matmul_dtype):
    def kernel(*refs):
        # ---- unpack refs: inputs, outputs, scratch (positional) ----
        idx = 0
        x_ref = refs[idx]; idx += 1                      # (T*Bp, I)   matmul dtype
        layers = []
        for _ in range(n_layers):
            layers.append((refs[idx], refs[idx + 1], refs[idx + 2]))
            idx += 3                                     # (in,4H), (H,4H), (1,4H)
        fcw_ref = refs[idx]; fcb_ref = refs[idx + 1]; idx += 2   # (H,O), (1,O)
        out_ref = refs[idx]; hidden_ref = refs[idx + 1]; idx += 2
        xproj_scr = refs[idx]; hseq_scr = refs[idx + 1]  # (T*Bp,4H), (T*Bp,H) f32

        h_last = None
        for l in range(n_layers):
            wih_ref, whh_ref, b_ref = layers[l]

            if l == 0:
                in_seq = x_ref[...]                                  # (T*Bp, I)
            else:
                in_seq = hseq_scr[...].astype(matmul_dtype)          # (T*Bp, H)

            # Hoisted input projection for ALL timesteps in one MXU matmul,
            # with the combined bias folded in.
            xproj_scr[...] = (
                jnp.dot(in_seq, wih_ref[...], preferred_element_type=jnp.float32)
                + b_ref[...]
            )

            whh = whh_ref[...]                                       # (H, 4H)
            write_seq = l < n_layers - 1   # last layer: only final h is consumed

            def step(t, carry, _whh=whh, _write_seq=write_seq):
                h, c = carry
                row = t * Bp
                xp = xproj_scr[pl.ds(row, Bp), :]                    # (Bp, 4H)
                gates = xp + jnp.dot(h.astype(matmul_dtype), _whh,
                                     preferred_element_type=jnp.float32)
                i_g = jax.nn.sigmoid(gates[:, 0 * H:1 * H])
                f_g = jax.nn.sigmoid(gates[:, 1 * H:2 * H])
                g_g = jnp.tanh(gates[:, 2 * H:3 * H])
                o_g = jax.nn.sigmoid(gates[:, 3 * H:4 * H])
                c_new = f_g * c + i_g * g_g
                h_new = o_g * jnp.tanh(c_new)
                if _write_seq:
                    hseq_scr[pl.ds(row, Bp), :] = h_new
                return (h_new, c_new)

            h0 = jnp.zeros((Bp, H), jnp.float32)
            c0 = jnp.zeros((Bp, H), jnp.float32)
            h_final, _ = lax.fori_loop(0, T, step, (h0, c0), unroll=True)

            hidden_ref[l] = h_final
            h_last = h_final

        # Fused FC head on the last layer's final hidden state.
        out_ref[...] = (
            jnp.dot(h_last.astype(matmul_dtype), fcw_ref[...],
                    preferred_element_type=jnp.float32)
            + fcb_ref[...]
        )

    return kernel


# ----------------------------------------------------------------------------
# Wrapper (matches RNN.forward: returns (out, hidden))
# ----------------------------------------------------------------------------
def rnn_forward(features, params, *, matmul_dtype=jnp.bfloat16):
    """features: (B, T, input_size) batch_first -> (out (B,O), hidden (L,B,H))."""
    B, T, I = features.shape
    H = params["lstm"][0][1].shape[1]          # w_hh: (4H, H)
    O = params["fc_w"].shape[0]
    n_layers = len(params["lstm"])
    Bp = _round_up(max(B, 8), 8)               # pad batch to sublane quantum

    # time-major, batch-padded, flattened to (T*Bp, I)
    x = jnp.transpose(features, (1, 0, 2))                 # (T, B, I)
    x = jnp.pad(x, ((0, 0), (0, Bp - B), (0, 0)))          # (T, Bp, I)
    x = x.reshape(T * Bp, I).astype(matmul_dtype)

    vmem_spec = pl.BlockSpec(memory_space=pltpu.MemorySpace.VMEM)
    inputs = [x]
    in_specs = [vmem_spec]
    for (w_ih, w_hh, b_ih, b_hh) in params["lstm"]:
        inputs.append(jnp.transpose(w_ih).astype(matmul_dtype))         # (in, 4H)
        inputs.append(jnp.transpose(w_hh).astype(matmul_dtype))         # (H, 4H)
        inputs.append((b_ih + b_hh).reshape(1, 4 * H).astype(jnp.float32))
        in_specs += [vmem_spec] * 3
    inputs.append(jnp.transpose(params["fc_w"]).astype(matmul_dtype))   # (H, O)
    inputs.append(params["fc_b"].reshape(1, O).astype(jnp.float32))
    in_specs += [vmem_spec] * 2

    kernel = make_rnn_kernel(n_layers, T, Bp, H, matmul_dtype)

    out_p, hidden_p = pl.pallas_call(
        kernel,
        out_shape=(
            jax.ShapeDtypeStruct((Bp, O), jnp.float32),
            jax.ShapeDtypeStruct((n_layers, Bp, H), jnp.float32),
        ),
        in_specs=in_specs,
        out_specs=(vmem_spec, vmem_spec),
        scratch_shapes=[
            pltpu.VMEM((T * Bp, 4 * H), jnp.float32),   # hoisted x-projection
            pltpu.VMEM((T * Bp, H), jnp.float32),       # inter-layer hidden sequence
        ],
    )(*inputs)

    return out_p[:B], hidden_p[:, :B, :]


# ----------------------------------------------------------------------------
# Pure-JAX reference (for correctness check), matmul dtype parameterized
# ----------------------------------------------------------------------------
def rnn_forward_ref(features, params, matmul_dtype=jnp.float32):
    dt = matmul_dtype
    x = jnp.transpose(features, (1, 0, 2))  # (T, B, I)
    B = features.shape[0]
    finals = []
    for (w_ih, w_hh, b_ih, b_hh) in params["lstm"]:
        H = w_hh.shape[1]
        wih_t = jnp.transpose(w_ih).astype(dt)
        whh_t = jnp.transpose(w_hh).astype(dt)
        b = (b_ih + b_hh).reshape(1, 4 * H)

        def step(carry, x_t, wih_t=wih_t, whh_t=whh_t, b=b, H=H):
            h, c = carry
            gates = (
                jnp.dot(x_t.astype(dt), wih_t, preferred_element_type=jnp.float32)
                + jnp.dot(h.astype(dt), whh_t, preferred_element_type=jnp.float32)
                + b
            )
            i_g = jax.nn.sigmoid(gates[:, 0 * H:1 * H])
            f_g = jax.nn.sigmoid(gates[:, 1 * H:2 * H])
            g_g = jnp.tanh(gates[:, 2 * H:3 * H])
            o_g = jax.nn.sigmoid(gates[:, 3 * H:4 * H])
            c_new = f_g * c + i_g * g_g
            h_new = o_g * jnp.tanh(c_new)
            return (h_new, c_new), h_new

        init = (jnp.zeros((B, H), jnp.float32), jnp.zeros((B, H), jnp.float32))
        (h_f, _), hs = lax.scan(step, init, x)
        x = hs
        finals.append(h_f)
    hidden = jnp.stack(finals, axis=0)
    out = (
        jnp.dot(hidden[-1].astype(dt), jnp.transpose(params["fc_w"]).astype(dt),
                preferred_element_type=jnp.float32)
        + params["fc_b"]
    )
    return out, hidden


# ----------------------------------------------------------------------------
# Deterministic parameter init (PyTorch-style uniform(-1/sqrt(H), 1/sqrt(H)))
# ----------------------------------------------------------------------------
def init_params(key, input_size, output_size, hidden_dim, n_layers):
    k = 1.0 / jnp.sqrt(jnp.float32(hidden_dim))
    params = {"lstm": []}
    for layer in range(n_layers):
        in_dim = input_size if layer == 0 else hidden_dim
        key, k1, k2, k3, k4 = jax.random.split(key, 5)
        w_ih = jax.random.uniform(k1, (4 * hidden_dim, in_dim), jnp.float32, -k, k)
        w_hh = jax.random.uniform(k2, (4 * hidden_dim, hidden_dim), jnp.float32, -k, k)
        b_ih = jax.random.uniform(k3, (4 * hidden_dim,), jnp.float32, -k, k)
        b_hh = jax.random.uniform(k4, (4 * hidden_dim,), jnp.float32, -k, k)
        params["lstm"].append((w_ih, w_hh, b_ih, b_hh))
    key, k1, k2 = jax.random.split(key, 3)
    params["fc_w"] = jax.random.uniform(k1, (output_size, hidden_dim), jnp.float32, -k, k)
    params["fc_b"] = jax.random.uniform(k2, (output_size,), jnp.float32, -k, k)
    return params


if __name__ == "__main__":
    B, T = 2, 8
    input_size, output_size, hidden_dim, n_layers = 16, 8, 32, 2

    key = jax.random.PRNGKey(0)
    key, pkey, xkey = jax.random.split(key, 3)
    params = init_params(pkey, input_size, output_size, hidden_dim, n_layers)
    features = jax.random.normal(xkey, (B, T, input_size), jnp.float32)

    # Full-precision matmul path: tight check vs pure-JAX reference.
    out32, hid32 = rnn_forward(features, params, matmul_dtype=jnp.float32)
    out32 = jax.block_until_ready(out32)
    hid32 = jax.block_until_ready(hid32)
    ref_out32, ref_hid32 = rnn_forward_ref(features, params, jnp.float32)
    assert out32.shape == (B, output_size)
    assert hid32.shape == (n_layers, B, hidden_dim)
    assert jnp.allclose(out32, ref_out32, atol=1e-5, rtol=1e-5)
    assert jnp.allclose(hid32, ref_hid32, atol=1e-5, rtol=1e-5)

    # Default bf16 MXU path: check vs bf16-matmul reference and loosely vs f32.
    out16, hid16 = rnn_forward(features, params, matmul_dtype=jnp.bfloat16)
    out16 = jax.block_until_ready(out16)
    hid16 = jax.block_until_ready(hid16)
    ref_out16, ref_hid16 = rnn_forward_ref(features, params, jnp.bfloat16)
    assert out16.shape == (B, output_size)
    assert hid16.shape == (n_layers, B, hidden_dim)
    assert jnp.allclose(out16, ref_out16, atol=5e-3, rtol=5e-3)
    assert jnp.allclose(hid16, ref_hid16, atol=5e-3, rtol=5e-3)
    assert jnp.allclose(out16, ref_out32, atol=5e-2, rtol=5e-2)
    assert jnp.allclose(hid16, ref_hid32, atol=5e-2, rtol=5e-2)

    print("KERNEL_OK")
</pallas_src>

<mosaic_0001>
module attributes {stable_mosaic.version = 11 : i64} {
  func.func @kernel(%arg0: memref<64x16xf32, #tpu.memory_space<vmem>>, %arg1: memref<16x128xf32, #tpu.memory_space<vmem>>, %arg2: memref<32x128xf32, #tpu.memory_space<vmem>>, %arg3: memref<1x128xf32, #tpu.memory_space<vmem>>, %arg4: memref<32x128xf32, #tpu.memory_space<vmem>>, %arg5: memref<32x128xf32, #tpu.memory_space<vmem>>, %arg6: memref<1x128xf32, #tpu.memory_space<vmem>>, %arg7: memref<32x8xf32, #tpu.memory_space<vmem>>, %arg8: memref<1x8xf32, #tpu.memory_space<vmem>>, %arg9: memref<8x8xf32, #tpu.memory_space<vmem>>, %arg10: memref<2x8x32xf32, #tpu.memory_space<vmem>>, %arg11: memref<64x128xf32, #tpu.memory_space<vmem>>, %arg12: memref<64x32xf32, #tpu.memory_space<vmem>>) attributes {dimension_semantics = [], scalar_prefetch = 0 : i64, scratch_operands = 2 : i64, tpu.core_type = #tpu.core_type<tc>} {
    %c0 = arith.constant 0 : index
    %c0_0 = arith.constant 0 : index
    %0 = vector.load %arg0[%c0, %c0_0] : memref<64x16xf32, #tpu.memory_space<vmem>>, vector<64x16xf32>
    %c0_1 = arith.constant 0 : index
    %c0_2 = arith.constant 0 : index
    %1 = vector.load %arg1[%c0_1, %c0_2] : memref<16x128xf32, #tpu.memory_space<vmem>>, vector<16x128xf32>
    %cst = arith.constant dense<0.000000e+00> : vector<64x128xf32>
    %2 = tpu.matmul %0, %1, %cst {dimension_numbers = #tpu.dot_dimension_numbers<[1], [0], [0], [1], [0, 0, 1, 1], [], []>} : vector<64x16xf32>, vector<16x128xf32>, vector<64x128xf32> -> vector<64x128xf32>
    %c0_3 = arith.constant 0 : index
    %c0_4 = arith.constant 0 : index
    %3 = vector.load %arg3[%c0_3, %c0_4] : memref<1x128xf32, #tpu.memory_space<vmem>>, vector<1x128xf32>
    %4 = vector.broadcast %3 : vector<1x128xf32> to vector<64x128xf32>
    %5 = arith.addf %2, %4 : vector<64x128xf32>
    %c0_5 = arith.constant 0 : index
    %c0_6 = arith.constant 0 : index
    %6 = vector.load %arg11[%c0_5, %c0_6] : memref<64x128xf32, #tpu.memory_space<vmem>>, vector<64x128xf32>
    tpu.vector_store %arg11[%c0_5, %c0_6], %5 {strides = array<i32>} : memref<64x128xf32, #tpu.memory_space<vmem>>, vector<64x128xf32>,
    %c0_7 = arith.constant 0 : index
    %c0_8 = arith.constant 0 : index
    %7 = vector.load %arg2[%c0_7, %c0_8] : memref<32x128xf32, #tpu.memory_space<vmem>>, vector<32x128xf32>
    %cst_9 = arith.constant 0.000000e+00 : f32
    %8 = vector.broadcast %cst_9 : f32 to vector<8x32xf32>
    %cst_10 = arith.constant 0.000000e+00 : f32
    %9 = vector.broadcast %cst_10 : f32 to vector<8x32xf32>
    %c0_i32 = arith.constant 0 : i32
    %c8_i32 = arith.constant 8 : i32
    %10 = arith.muli %c0_i32, %c8_i32 : i32
    %11 = arith.index_cast %10 : i32 to index
    %c0_11 = arith.constant 0 : index
    %12 = vector.load %arg11[%11, %c0_11] : memref<64x128xf32, #tpu.memory_space<vmem>>, vector<8x128xf32>
    %cst_12 = arith.constant dense<0.000000e+00> : vector<8x128xf32>
    %13 = tpu.matmul %8, %7, %cst_12 {dimension_numbers = #tpu.dot_dimension_numbers<[1], [0], [0], [1], [0, 0, 1, 1], [], []>} : vector<8x32xf32>, vector<32x128xf32>, vector<8x128xf32> -> vector<8x128xf32>
    %14 = arith.addf %12, %13 : vector<8x128xf32>
    %15 = vector.extract_strided_slice %14 {offsets = [0, 0], sizes = [8, 32], strides = [1, 1]} : vector<8x128xf32> to vector<8x32xf32>
    %16 = arith.negf %15 : vector<8x32xf32>
    %17 = math.exp %16 : vector<8x32xf32>
    %cst_13 = arith.constant 1.000000e+00 : f32
    %18 = vector.broadcast %cst_13 : f32 to vector<8x32xf32>
    %19 = arith.addf %18, %17 : vector<8x32xf32>
    %20 = arith.divf %18, %19 : vector<8x32xf32>
    %21 = vector.extract_strided_slice %14 {offsets = [0, 32], sizes = [8, 32], strides = [1, 1]} : vector<8x128xf32> to vector<8x32xf32>
    %22 = arith.negf %21 : vector<8x32xf32>
    %23 = math.exp %22 : vector<8x32xf32>
    %cst_14 = arith.constant 1.000000e+00 : f32
    %24 = vector.broadcast %cst_14 : f32 to vector<8x32xf32>
    %25 = arith.addf %24, %23 : vector<8x32xf32>
    %26 = arith.divf %24, %25 : vector<8x32xf32>
    %27 = vector.extract_strided_slice %14 {offsets = [0, 64], sizes = [8, 32], strides = [1, 1]} : vector<8x128xf32> to vector<8x32xf32>
    %28 = math.tanh %27 : vector<8x32xf32>
    %29 = vector.extract_strided_slice %14 {offsets = [0, 96], sizes = [8, 32], strides = [1, 1]} : vector<8x128xf32> to vector<8x32xf32>
    %30 = arith.negf %29 : vector<8x32xf32>
    %31 = math.exp %30 : vector<8x32xf32>
    %cst_15 = arith.constant 1.000000e+00 : f32
    %32 = vector.broadcast %cst_15 : f32 to vector<8x32xf32>
    %33 = arith.addf %32, %31 : vector<8x32xf32>
    %34 = arith.divf %32, %33 : vector<8x32xf32>
    %35 = arith.mulf %26, %9 : vector<8x32xf32>
    %36 = arith.mulf %20, %28 : vector<8x32xf32>
    %37 = arith.addf %35, %36 : vector<8x32xf32>
    %38 = math.tanh %37 : vector<8x32xf32>
    %39 = arith.mulf %34, %38 : vector<8x32xf32>
    %40 = arith.index_cast %10 : i32 to index
    %c0_16 = arith.constant 0 : index
    %41 = vector.load %arg12[%40, %c0_16] : memref<64x32xf32, #tpu.memory_space<vmem>>, vector<8x32xf32>
    tpu.vector_store %arg12[%40, %c0_16], %39 {strides = array<i32>} : memref<64x32xf32, #tpu.memory_space<vmem>>, vector<8x32xf32>,
    %c1_i32 = arith.constant 1 : i32
    %c8_i32_17 = arith.constant 8 : i32
    %42 = arith.muli %c1_i32, %c8_i32_17 : i32
    %43 = arith.index_cast %42 : i32 to index
    %c0_18 = arith.constant 0 : index
    %44 = vector.load %arg11[%43, %c0_18] : memref<64x128xf32, #tpu.memory_space<vmem>>, vector<8x128xf32>
    %cst_19 = arith.constant dense<0.000000e+00> : vector<8x128xf32>
    %45 = tpu.matmul %39, %7, %cst_19 {dimension_numbers = #tpu.dot_dimension_numbers<[1], [0], [0], [1], [0, 0, 1, 1], [], []>} : vector<8x32xf32>, vector<32x128xf32>, vector<8x128xf32> -> vector<8x128xf32>
    %46 = arith.addf %44, %45 : vector<8x128xf32>
    %47 = vector.extract_strided_slice %46 {offsets = [0, 0], sizes = [8, 32], strides = [1, 1]} : vector<8x128xf32> to vector<8x32xf32>
    %48 = arith.negf %47 : vector<8x32xf32>
    %49 = math.exp %48 : vector<8x32xf32>
    %cst_20 = arith.constant 1.000000e+00 : f32
    %50 = vector.broadcast %cst_20 : f32 to vector<8x32xf32>
    %51 = arith.addf %50, %49 : vector<8x32xf32>
    %52 = arith.divf %50, %51 : vector<8x32xf32>
    %53 = vector.extract_strided_slice %46 {offsets = [0, 32], sizes = [8, 32], strides = [1, 1]} : vector<8x128xf32> to vector<8x32xf32>
    %54 = arith.negf %53 : vector<8x32xf32>
    %55 = math.exp %54 : vector<8x32xf32>
    %cst_21 = arith.constant 1.000000e+00 : f32
    %56 = vector.broadcast %cst_21 : f32 to vector<8x32xf32>
    %57 = arith.addf %56, %55 : vector<8x32xf32>
    %58 = arith.divf %56, %57 : vector<8x32xf32>
    %59 = vector.extract_strided_slice %46 {offsets = [0, 64], sizes = [8, 32], strides = [1, 1]} : vector<8x128xf32> to vector<8x32xf32>
    %60 = math.tanh %59 : vector<8x32xf32>
    %61 = vector.extract_strided_slice %46 {offsets = [0, 96], sizes = [8, 32], strides = [1, 1]} : vector<8x128xf32> to vector<8x32xf32>
    %62 = arith.negf %61 : vector<8x32xf32>
    %63 = math.exp %62 : vector<8x32xf32>
    %cst_22 = arith.constant 1.000000e+00 : f32
    %64 = vector.broadcast %cst_22 : f32 to vector<8x32xf32>
    %65 = arith.addf %64, %63 : vector<8x32xf32>
    %66 = arith.divf %64, %65 : vector<8x32xf32>
    %67 = arith.mulf %58, %37 : vector<8x32xf32>
    %68 = arith.mulf %52, %60 : vector<8x32xf32>
    %69 = arith.addf %67, %68 : vector<8x32xf32>
    %70 = math.tanh %69 : vector<8x32xf32>
    %71 = arith.mulf %66, %70 : vector<8x32xf32>
    %72 = arith.index_cast %42 : i32 to index
    %c0_23 = arith.constant 0 : index
    %73 = vector.load %arg12[%72, %c0_23] : memref<64x32xf32, #tpu.memory_space<vmem>>, vector<8x32xf32>
    tpu.vector_store %arg12[%72, %c0_23], %71 {strides = array<i32>} : memref<64x32xf32, #tpu.memory_space<vmem>>, vector<8x32xf32>,
    %c2_i32 = arith.constant 2 : i32
    %c8_i32_24 = arith.constant 8 : i32
    %74 = arith.muli %c2_i32, %c8_i32_24 : i32
    %75 = arith.index_cast %74 : i32 to index
    %c0_25 = arith.constant 0 : index
    %76 = vector.load %arg11[%75, %c0_25] : memref<64x128xf32, #tpu.memory_space<vmem>>, vector<8x128xf32>
    %cst_26 = arith.constant dense<0.000000e+00> : vector<8x128xf32>
    %77 = tpu.matmul %71, %7, %cst_26 {dimension_numbers = #tpu.dot_dimension_numbers<[1], [0], [0], [1], [0, 0, 1, 1], [], []>} : vector<8x32xf32>, vector<32x128xf32>, vector<8x128xf32> -> vector<8x128xf32>
    %78 = arith.addf %76, %77 : vector<8x128xf32>
    %79 = vector.extract_strided_slice %78 {offsets = [0, 0], sizes = [8, 32], strides = [1, 1]} : vector<8x128xf32> to vector<8x32xf32>
    %80 = arith.negf %79 : vector<8x32xf32>
    %81 = math.exp %80 : vector<8x32xf32>
    %cst_27 = arith.constant 1.000000e+00 : f32
    %82 = vector.broadcast %cst_27 : f32 to vector<8x32xf32>
    %83 = arith.addf %82, %81 : vector<8x32xf32>
    %84 = arith.divf %82, %83 : vector<8x32xf32>
    %85 = vector.extract_strided_slice %78 {offsets = [0, 32], sizes = [8, 32], strides = [1, 1]} : vector<8x128xf32> to vector<8x32xf32>
    %86 = arith.negf %85 : vector<8x32xf32>
    %87 = math.exp %86 : vector<8x32xf32>
    %cst_28 = arith.constant 1.000000e+00 : f32
    %88 = vector.broadcast %cst_28 : f32 to vector<8x32xf32>
    %89 = arith.addf %88, %87 : vector<8x32xf32>
    %90 = arith.divf %88, %89 : vector<8x32xf32>
    %91 = vector.extract_strided_slice %78 {offsets = [0, 64], sizes = [8, 32], strides = [1, 1]} : vector<8x128xf32> to vector<8x32xf32>
    %92 = math.tanh %91 : vector<8x32xf32>
    %93 = vector.extract_strided_slice %78 {offsets = [0, 96], sizes = [8, 32], strides = [1, 1]} : vector<8x128xf32> to vector<8x32xf32>
    %94 = arith.negf %93 : vector<8x32xf32>
    %95 = math.exp %94 : vector<8x32xf32>
    %cst_29 = arith.constant 1.000000e+00 : f32
    %96 = vector.broadcast %cst_29 : f32 to vector<8x32xf32>
    %97 = arith.addf %96, %95 : vector<8x32xf32>
    %98 = arith.divf %96, %97 : vector<8x32xf32>
    %99 = arith.mulf %90, %69 : vector<8x32xf32>
    %100 = arith.mulf %84, %92 : vector<8x32xf32>
    %101 = arith.addf %99, %100 : vector<8x32xf32>
    %102 = math.tanh %101 : vector<8x32xf32>
    %103 = arith.mulf %98, %102 : vector<8x32xf32>
    %104 = arith.index_cast %74 : i32 to index
    %c0_30 = arith.constant 0 : index
    %105 = vector.load %arg12[%104, %c0_30] : memref<64x32xf32, #tpu.memory_space<vmem>>, vector<8x32xf32>
    tpu.vector_store %arg12[%104, %c0_30], %103 {strides = array<i32>} : memref<64x32xf32, #tpu.memory_space<vmem>>, vector<8x32xf32>,
    %c3_i32 = arith.constant 3 : i32
    %c8_i32_31 = arith.constant 8 : i32
    %106 = arith.muli %c3_i32, %c8_i32_31 : i32
    %107 = arith.index_cast %106 : i32 to index
    %c0_32 = arith.constant 0 : index
    %108 = vector.load %arg11[%107, %c0_32] : memref<64x128xf32, #tpu.memory_space<vmem>>, vector<8x128xf32>
    %cst_33 = arith.constant dense<0.000000e+00> : vector<8x128xf32>
    %109 = tpu.matmul %103, %7, %cst_33 {dimension_numbers = #tpu.dot_dimension_numbers<[1], [0], [0], [1], [0, 0, 1, 1], [], []>} : vector<8x32xf32>, vector<32x128xf32>, vector<8x128xf32> -> vector<8x128xf32>
    %110 = arith.addf %108, %109 : vector<8x128xf32>
    %111 = vector.extract_strided_slice %110 {offsets = [0, 0], sizes = [8, 32], strides = [1, 1]} : vector<8x128xf32> to vector<8x32xf32>
    %112 = arith.negf %111 : vector<8x32xf32>
    %113 = math.exp %112 : vector<8x32xf32>
    %cst_34 = arith.constant 1.000000e+00 : f32
    %114 = vector.broadcast %cst_34 : f32 to vector<8x32xf32>
    %115 = arith.addf %114, %113 : vector<8x32xf32>
    %116 = arith.divf %114, %115 : vector<8x32xf32>
    %117 = vector.extract_strided_slice %110 {offsets = [0, 32], sizes = [8, 32], strides = [1, 1]} : vector<8x128xf32> to vector<8x32xf32>
    %118 = arith.negf %117 : vector<8x32xf32>
    %119 = math.exp %118 : vector<8x32xf32>
    %cst_35 = arith.constant 1.000000e+00 : f32
    %120 = vector.broadcast %cst_35 : f32 to vector<8x32xf32>
    %121 = arith.addf %120, %119 : vector<8x32xf32>
    %122 = arith.divf %120, %121 : vector<8x32xf32>
    %123 = vector.extract_strided_slice %110 {offsets = [0, 64], sizes = [8, 32], strides = [1, 1]} : vector<8x128xf32> to vector<8x32xf32>
    %124 = math.tanh %123 : vector<8x32xf32>
    %125 = vector.extract_strided_slice %110 {offsets = [0, 96], sizes = [8, 32], strides = [1, 1]} : vector<8x128xf32> to vector<8x32xf32>
    %126 = arith.negf %125 : vector<8x32xf32>
    %127 = math.exp %126 : vector<8x32xf32>
    %cst_36 = arith.constant 1.000000e+00 : f32
    %128 = vector.broadcast %cst_36 : f32 to vector<8x32xf32>
    %129 = arith.addf %128, %127 : vector<8x32xf32>
    %130 = arith.divf %128, %129 : vector<8x32xf32>
    %131 = arith.mulf %122, %101 : vector<8x32xf32>
    %132 = arith.mulf %116, %124 : vector<8x32xf32>
    %133 = arith.addf %131, %132 : vector<8x32xf32>
    %134 = math.tanh %133 : vector<8x32xf32>
    %135 = arith.mulf %130, %134 : vector<8x32xf32>
    %136 = arith.index_cast %106 : i32 to index
    %c0_37 = arith.constant 0 : index
    %137 = vector.load %arg12[%136, %c0_37] : memref<64x32xf32, #tpu.memory_space<vmem>>, vector<8x32xf32>
    tpu.vector_store %arg12[%136, %c0_37], %135 {strides = array<i32>} : memref<64x32xf32, #tpu.memory_space<vmem>>, vector<8x32xf32>,
    %c4_i32 = arith.constant 4 : i32
    %c8_i32_38 = arith.constant 8 : i32
    %138 = arith.muli %c4_i32, %c8_i32_38 : i32
    %139 = arith.index_cast %138 : i32 to index
    %c0_39 = arith.constant 0 : index
    %140 = vector.load %arg11[%139, %c0_39] : memref<64x128xf32, #tpu.memory_space<vmem>>, vector<8x128xf32>
    %cst_40 = arith.constant dense<0.000000e+00> : vector<8x128xf32>
    %141 = tpu.matmul %135, %7, %cst_40 {dimension_numbers = #tpu.dot_dimension_numbers<[1], [0], [0], [1], [0, 0, 1, 1], [], []>} : vector<8x32xf32>, vector<32x128xf32>, vector<8x128xf32> -> vector<8x128xf32>
    %142 = arith.addf %140, %141 : vector<8x128xf32>
    %143 = vector.extract_strided_slice %142 {offsets = [0, 0], sizes = [8, 32], strides = [1, 1]} : vector<8x128xf32> to vector<8x32xf32>
    %144 = arith.negf %143 : vector<8x32xf32>
    %145 = math.exp %144 : vector<8x32xf32>
    %cst_41 = arith.constant 1.000000e+00 : f32
    %146 = vector.broadcast %cst_41 : f32 to vector<8x32xf32>
    %147 = arith.addf %146, %145 : vector<8x32xf32>
    %148 = arith.divf %146, %147 : vector<8x32xf32>
    %149 = vector.extract_strided_slice %142 {offsets = [0, 32], sizes = [8, 32], strides = [1, 1]} : vector<8x128xf32> to vector<8x32xf32>
    %150 = arith.negf %149 : vector<8x32xf32>
    %151 = math.exp %150 : vector<8x32xf32>
    %cst_42 = arith.constant 1.000000e+00 : f32
    %152 = vector.broadcast %cst_42 : f32 to vector<8x32xf32>
    %153 = arith.addf %152, %151 : vector<8x32xf32>
    %154 = arith.divf %152, %153 : vector<8x32xf32>
    %155 = vector.extract_strided_slice %142 {offsets = [0, 64], sizes = [8, 32], strides = [1, 1]} : vector<8x128xf32> to vector<8x32xf32>
    %156 = math.tanh %155 : vector<8x32xf32>
    %157 = vector.extract_strided_slice %142 {offsets = [0, 96], sizes = [8, 32], strides = [1, 1]} : vector<8x128xf32> to vector<8x32xf32>
    %158 = arith.negf %157 : vector<8x32xf32>
    %159 = math.exp %158 : vector<8x32xf32>
    %cst_43 = arith.constant 1.000000e+00 : f32
    %160 = vector.broadcast %cst_43 : f32 to vector<8x32xf32>
    %161 = arith.addf %160, %159 : vector<8x32xf32>
    %162 = arith.divf %160, %161 : vector<8x32xf32>
    %163 = arith.mulf %154, %133 : vector<8x32xf32>
    %164 = arith.mulf %148, %156 : vector<8x32xf32>
    %165 = arith.addf %163, %164 : vector<8x32xf32>
    %166 = math.tanh %165 : vector<8x32xf32>
    %167 = arith.mulf %162, %166 : vector<8x32xf32>
    %168 = arith.index_cast %138 : i32 to index
    %c0_44 = arith.constant 0 : index
    %169 = vector.load %arg12[%168, %c0_44] : memref<64x32xf32, #tpu.memory_space<vmem>>, vector<8x32xf32>
    tpu.vector_store %arg12[%168, %c0_44], %167 {strides = array<i32>} : memref<64x32xf32, #tpu.memory_space<vmem>>, vector<8x32xf32>,
    %c5_i32 = arith.constant 5 : i32
    %c8_i32_45 = arith.constant 8 : i32
    %170 = arith.muli %c5_i32, %c8_i32_45 : i32
    %171 = arith.index_cast %170 : i32 to index
    %c0_46 = arith.constant 0 : index
    %172 = vector.load %arg11[%171, %c0_46] : memref<64x128xf32, #tpu.memory_space<vmem>>, vector<8x128xf32>
    %cst_47 = arith.constant dense<0.000000e+00> : vector<8x128xf32>
    %173 = tpu.matmul %167, %7, %cst_47 {dimension_numbers = #tpu.dot_dimension_numbers<[1], [0], [0], [1], [0, 0, 1, 1], [], []>} : vector<8x32xf32>, vector<32x128xf32>, vector<8x128xf32> -> vector<8x128xf32>
    %174 = arith.addf %172, %173 : vector<8x128xf32>
    %175 = vector.extract_strided_slice %174 {offsets = [0, 0], sizes = [8, 32], strides = [1, 1]} : vector<8x128xf32> to vector<8x32xf32>
    %176 = arith.negf %175 : vector<8x32xf32>
    %177 = math.exp %176 : vector<8x32xf32>
    %cst_48 = arith.constant 1.000000e+00 : f32
    %178 = vector.broadcast %cst_48 : f32 to vector<8x32xf32>
    %179 = arith.addf %178, %177 : vector<8x32xf32>
    %180 = arith.divf %178, %179 : vector<8x32xf32>
    %181 = vector.extract_strided_slice %174 {offsets = [0, 32], sizes = [8, 32], strides = [1, 1]} : vector<8x128xf32> to vector<8x32xf32>
    %182 = arith.negf %181 : vector<8x32xf32>
    %183 = math.exp %182 : vector<8x32xf32>
    %cst_49 = arith.constant 1.000000e+00 : f32
    %184 = vector.broadcast %cst_49 : f32 to vector<8x32xf32>
    %185 = arith.addf %184, %183 : vector<8x32xf32>
    %186 = arith.divf %184, %185 : vector<8x32xf32>
    %187 = vector.extract_strided_slice %174 {offsets = [0, 64], sizes = [8, 32], strides = [1, 1]} : vector<8x128xf32> to vector<8x32xf32>
    %188 = math.tanh %187 : vector<8x32xf32>
    %189 = vector.extract_strided_slice %174 {offsets = [0, 96], sizes = [8, 32], strides = [1, 1]} : vector<8x128xf32> to vector<8x32xf32>
    %190 = arith.negf %189 : vector<8x32xf32>
    %191 = math.exp %190 : vector<8x32xf32>
    %cst_50 = arith.constant 1.000000e+00 : f32
    %192 = vector.broadcast %cst_50 : f32 to vector<8x32xf32>
    %193 = arith.addf %192, %191 : vector<8x32xf32>
    %194 = arith.divf %192, %193 : vector<8x32xf32>
    %195 = arith.mulf %186, %165 : vector<8x32xf32>
    %196 = arith.mulf %180, %188 : vector<8x32xf32>
    %197 = arith.addf %195, %196 : vector<8x32xf32>
    %198 = math.tanh %197 : vector<8x32xf32>
    %199 = arith.mulf %194, %198 : vector<8x32xf32>
    %200 = arith.index_cast %170 : i32 to index
    %c0_51 = arith.constant 0 : index
    %201 = vector.load %arg12[%200, %c0_51] : memref<64x32xf32, #tpu.memory_space<vmem>>, vector<8x32xf32>
    tpu.vector_store %arg12[%200, %c0_51], %199 {strides = array<i32>} : memref<64x32xf32, #tpu.memory_space<vmem>>, vector<8x32xf32>,
    %c6_i32 = arith.constant 6 : i32
    %c8_i32_52 = arith.constant 8 : i32
    %202 = arith.muli %c6_i32, %c8_i32_52 : i32
    %203 = arith.index_cast %202 : i32 to index
    %c0_53 = arith.constant 0 : index
    %204 = vector.load %arg11[%203, %c0_53] : memref<64x128xf32, #tpu.memory_space<vmem>>, vector<8x128xf32>
    %cst_54 = arith.constant dense<0.000000e+00> : vector<8x128xf32>
    %205 = tpu.matmul %199, %7, %cst_54 {dimension_numbers = #tpu.dot_dimension_numbers<[1], [0], [0], [1], [0, 0, 1, 1], [], []>} : vector<8x32xf32>, vector<32x128xf32>, vector<8x128xf32> -> vector<8x128xf32>
    %206 = arith.addf %204, %205 : vector<8x128xf32>
    %207 = vector.extract_strided_slice %206 {offsets = [0, 0], sizes = [8, 32], strides = [1, 1]} : vector<8x128xf32> to vector<8x32xf32>
    %208 = arith.negf %207 : vector<8x32xf32>
    %209 = math.exp %208 : vector<8x32xf32>
    %cst_55 = arith.constant 1.000000e+00 : f32
    %210 = vector.broadcast %cst_55 : f32 to vector<8x32xf32>
    %211 = arith.addf %210, %209 : vector<8x32xf32>
    %212 = arith.divf %210, %211 : vector<8x32xf32>
    %213 = vector.extract_strided_slice %206 {offsets = [0, 32], sizes = [8, 32], strides = [1, 1]} : vector<8x128xf32> to vector<8x32xf32>
    %214 = arith.negf %213 : vector<8x32xf32>
    %215 = math.exp %214 : vector<8x32xf32>
    %cst_56 = arith.constant 1.000000e+00 : f32
    %216 = vector.broadcast %cst_56 : f32 to vector<8x32xf32>
    %217 = arith.addf %216, %215 : vector<8x32xf32>
    %218 = arith.divf %216, %217 : vector<8x32xf32>
    %219 = vector.extract_strided_slice %206 {offsets = [0, 64], sizes = [8, 32], strides = [1, 1]} : vector<8x128xf32> to vector<8x32xf32>
    %220 = math.tanh %219 : vector<8x32xf32>
    %221 = vector.extract_strided_slice %206 {offsets = [0, 96], sizes = [8, 32], strides = [1, 1]} : vector<8x128xf32> to vector<8x32xf32>
    %222 = arith.negf %221 : vector<8x32xf32>
    %223 = math.exp %222 : vector<8x32xf32>
    %cst_57 = arith.constant 1.000000e+00 : f32
    %224 = vector.broadcast %cst_57 : f32 to vector<8x32xf32>
    %225 = arith.addf %224, %223 : vector<8x32xf32>
    %226 = arith.divf %224, %225 : vector<8x32xf32>
    %227 = arith.mulf %218, %197 : vector<8x32xf32>
    %228 = arith.mulf %212, %220 : vector<8x32xf32>
    %229 = arith.addf %227, %228 : vector<8x32xf32>
    %230 = math.tanh %229 : vector<8x32xf32>
    %231 = arith.mulf %226, %230 : vector<8x32xf32>
    %232 = arith.index_cast %202 : i32 to index
    %c0_58 = arith.constant 0 : index
    %233 = vector.load %arg12[%232, %c0_58] : memref<64x32xf32, #tpu.memory_space<vmem>>, vector<8x32xf32>
    tpu.vector_store %arg12[%232, %c0_58], %231 {strides = array<i32>} : memref<64x32xf32, #tpu.memory_space<vmem>>, vector<8x32xf32>,
    %c7_i32 = arith.constant 7 : i32
    %c8_i32_59 = arith.constant 8 : i32
    %234 = arith.muli %c7_i32, %c8_i32_59 : i32
    %235 = arith.index_cast %234 : i32 to index
    %c0_60 = arith.constant 0 : index
    %236 = vector.load %arg11[%235, %c0_60] : memref<64x128xf32, #tpu.memory_space<vmem>>, vector<8x128xf32>
    %cst_61 = arith.constant dense<0.000000e+00> : vector<8x128xf32>
    %237 = tpu.matmul %231, %7, %cst_61 {dimension_numbers = #tpu.dot_dimension_numbers<[1], [0], [0], [1], [0, 0, 1, 1], [], []>} : vector<8x32xf32>, vector<32x128xf32>, vector<8x128xf32> -> vector<8x128xf32>
    %238 = arith.addf %236, %237 : vector<8x128xf32>
    %239 = vector.extract_strided_slice %238 {offsets = [0, 0], sizes = [8, 32], strides = [1, 1]} : vector<8x128xf32> to vector<8x32xf32>
    %240 = arith.negf %239 : vector<8x32xf32>
    %241 = math.exp %240 : vector<8x32xf32>
    %cst_62 = arith.constant 1.000000e+00 : f32
    %242 = vector.broadcast %cst_62 : f32 to vector<8x32xf32>
    %243 = arith.addf %242, %241 : vector<8x32xf32>
    %244 = arith.divf %242, %243 : vector<8x32xf32>
    %245 = vector.extract_strided_slice %238 {offsets = [0, 32], sizes = [8, 32], strides = [1, 1]} : vector<8x128xf32> to vector<8x32xf32>
    %246 = arith.negf %245 : vector<8x32xf32>
    %247 = math.exp %246 : vector<8x32xf32>
    %cst_63 = arith.constant 1.000000e+00 : f32
    %248 = vector.broadcast %cst_63 : f32 to vector<8x32xf32>
    %249 = arith.addf %248, %247 : vector<8x32xf32>
    %250 = arith.divf %248, %249 : vector<8x32xf32>
    %251 = vector.extract_strided_slice %238 {offsets = [0, 64], sizes = [8, 32], strides = [1, 1]} : vector<8x128xf32> to vector<8x32xf32>
    %252 = math.tanh %251 : vector<8x32xf32>
    %253 = vector.extract_strided_slice %238 {offsets = [0, 96], sizes = [8, 32], strides = [1, 1]} : vector<8x128xf32> to vector<8x32xf32>
    %254 = arith.negf %253 : vector<8x32xf32>
    %255 = math.exp %254 : vector<8x32xf32>
    %cst_64 = arith.constant 1.000000e+00 : f32
    %256 = vector.broadcast %cst_64 : f32 to vector<8x32xf32>
    %257 = arith.addf %256, %255 : vector<8x32xf32>
    %258 = arith.divf %256, %257 : vector<8x32xf32>
    %259 = arith.mulf %250, %229 : vector<8x32xf32>
    %260 = arith.mulf %244, %252 : vector<8x32xf32>
    %261 = arith.addf %259, %260 : vector<8x32xf32>
    %262 = math.tanh %261 : vector<8x32xf32>
    %263 = arith.mulf %258, %262 : vector<8x32xf32>
    %264 = arith.index_cast %234 : i32 to index
    %c0_65 = arith.constant 0 : index
    %265 = vector.load %arg12[%264, %c0_65] : memref<64x32xf32, #tpu.memory_space<vmem>>, vector<8x32xf32>
    tpu.vector_store %arg12[%264, %c0_65], %263 {strides = array<i32>} : memref<64x32xf32, #tpu.memory_space<vmem>>, vector<8x32xf32>,
    %c8_i32_66 = arith.constant 8 : i32
    %c0_67 = arith.constant 0 : index
    %c0_68 = arith.constant 0 : index
    %c0_69 = arith.constant 0 : index
    %266 = vector.load %arg10[%c0_67, %c0_68, %c0_69] : memref<2x8x32xf32, #tpu.memory_space<vmem>>, vector<1x8x32xf32>
    %267 = vector.shape_cast %266 : vector<1x8x32xf32> to vector<8x32xf32>
    %268 = vector.shape_cast %263 : vector<8x32xf32> to vector<1x8x32xf32>
    tpu.vector_store %arg10[%c0_67, %c0_68, %c0_69], %268 {strides = array<i32>} : memref<2x8x32xf32, #tpu.memory_space<vmem>>, vector<1x8x32xf32>,
    %c0_70 = arith.constant 0 : index
    %c0_71 = arith.constant 0 : index
    %269 = vector.load %arg12[%c0_70, %c0_71] : memref<64x32xf32, #tpu.memory_space<vmem>>, vector<64x32xf32>
    %c0_72 = arith.constant 0 : index
    %c0_73 = arith.constant 0 : index
    %270 = vector.load %arg4[%c0_72, %c0_73] : memref<32x128xf32, #tpu.memory_space<vmem>>, vector<32x128xf32>
    %cst_74 = arith.constant dense<0.000000e+00> : vector<64x128xf32>
    %271 = tpu.matmul %269, %270, %cst_74 {dimension_numbers = #tpu.dot_dimension_numbers<[1], [0], [0], [1], [0, 0, 1, 1], [], []>} : vector<64x32xf32>, vector<32x128xf32>, vector<64x128xf32> -> vector<64x128xf32>
    %c0_75 = arith.constant 0 : index
    %c0_76 = arith.constant 0 : index
    %272 = vector.load %arg6[%c0_75, %c0_76] : memref<1x128xf32, #tpu.memory_space<vmem>>, vector<1x128xf32>
    %273 = vector.broadcast %272 : vector<1x128xf32> to vector<64x128xf32>
    %274 = arith.addf %271, %273 : vector<64x128xf32>
    %c0_77 = arith.constant 0 : index
    %c0_78 = arith.constant 0 : index
    %275 = vector.load %arg11[%c0_77, %c0_78] : memref<64x128xf32, #tpu.memory_space<vmem>>, vector<64x128xf32>
    tpu.vector_store %arg11[%c0_77, %c0_78], %274 {strides = array<i32>} : memref<64x128xf32, #tpu.memory_space<vmem>>, vector<64x128xf32>,
    %c0_79 = arith.constant 0 : index
    %c0_80 = arith.constant 0 : index
    %276 = vector.load %arg5[%c0_79, %c0_80] : memref<32x128xf32, #tpu.memory_space<vmem>>, vector<32x128xf32>
    %cst_81 = arith.constant 0.000000e+00 : f32
    %277 = vector.broadcast %cst_81 : f32 to vector<8x32xf32>
    %cst_82 = arith.constant 0.000000e+00 : f32
    %278 = vector.broadcast %cst_82 : f32 to vector<8x32xf32>
    %c0_i32_83 = arith.constant 0 : i32
    %c8_i32_84 = arith.constant 8 : i32
    %279 = arith.muli %c0_i32_83, %c8_i32_84 : i32
    %280 = arith.index_cast %279 : i32 to index
    %c0_85 = arith.constant 0 : index
    %281 = vector.load %arg11[%280, %c0_85] : memref<64x128xf32, #tpu.memory_space<vmem>>, vector<8x128xf32>
    %cst_86 = arith.constant dense<0.000000e+00> : vector<8x128xf32>
    %282 = tpu.matmul %277, %276, %cst_86 {dimension_numbers = #tpu.dot_dimension_numbers<[1], [0], [0], [1], [0, 0, 1, 1], [], []>} : vector<8x32xf32>, vector<32x128xf32>, vector<8x128xf32> -> vector<8x128xf32>
    %283 = arith.addf %281, %282 : vector<8x128xf32>
    %284 = vector.extract_strided_slice %283 {offsets = [0, 0], sizes = [8, 32], strides = [1, 1]} : vector<8x128xf32> to vector<8x32xf32>
    %285 = arith.negf %284 : vector<8x32xf32>
    %286 = math.exp %285 : vector<8x32xf32>
    %cst_87 = arith.constant 1.000000e+00 : f32
    %287 = vector.broadcast %cst_87 : f32 to vector<8x32xf32>
    %288 = arith.addf %287, %286 : vector<8x32xf32>
    %289 = arith.divf %287, %288 : vector<8x32xf32>
    %290 = vector.extract_strided_slice %283 {offsets = [0, 32], sizes = [8, 32], strides = [1, 1]} : vector<8x128xf32> to vector<8x32xf32>
    %291 = arith.negf %290 : vector<8x32xf32>
    %292 = math.exp %291 : vector<8x32xf32>
    %cst_88 = arith.constant 1.000000e+00 : f32
    %293 = vector.broadcast %cst_88 : f32 to vector<8x32xf32>
    %294 = arith.addf %293, %292 : vector<8x32xf32>
    %295 = arith.divf %293, %294 : vector<8x32xf32>
    %296 = vector.extract_strided_slice %283 {offsets = [0, 64], sizes = [8, 32], strides = [1, 1]} : vector<8x128xf32> to vector<8x32xf32>
    %297 = math.tanh %296 : vector<8x32xf32>
    %298 = vector.extract_strided_slice %283 {offsets = [0, 96], sizes = [8, 32], strides = [1, 1]} : vector<8x128xf32> to vector<8x32xf32>
    %299 = arith.negf %298 : vector<8x32xf32>
    %300 = math.exp %299 : vector<8x32xf32>
    %cst_89 = arith.constant 1.000000e+00 : f32
    %301 = vector.broadcast %cst_89 : f32 to vector<8x32xf32>
    %302 = arith.addf %301, %300 : vector<8x32xf32>
    %303 = arith.divf %301, %302 : vector<8x32xf32>
    %304 = arith.mulf %295, %278 : vector<8x32xf32>
    %305 = arith.mulf %289, %297 : vector<8x32xf32>
    %306 = arith.addf %304, %305 : vector<8x32xf32>
    %307 = math.tanh %306 : vector<8x32xf32>
    %308 = arith.mulf %303, %307 : vector<8x32xf32>
    %c1_i32_90 = arith.constant 1 : i32
    %c8_i32_91 = arith.constant 8 : i32
    %309 = arith.muli %c1_i32_90, %c8_i32_91 : i32
    %310 = arith.index_cast %309 : i32 to index
    %c0_92 = arith.constant 0 : index
    %311 = vector.load %arg11[%310, %c0_92] : memref<64x128xf32, #tpu.memory_space<vmem>>, vector<8x128xf32>
    %cst_93 = arith.constant dense<0.000000e+00> : vector<8x128xf32>
    %312 = tpu.matmul %308, %276, %cst_93 {dimension_numbers = #tpu.dot_dimension_numbers<[1], [0], [0], [1], [0, 0, 1, 1], [], []>} : vector<8x32xf32>, vector<32x128xf32>, vector<8x128xf32> -> vector<8x128xf32>
    %313 = arith.addf %311, %312 : vector<8x128xf32>
    %314 = vector.extract_strided_slice %313 {offsets = [0, 0], sizes = [8, 32], strides = [1, 1]} : vector<8x128xf32> to vector<8x32xf32>
    %315 = arith.negf %314 : vector<8x32xf32>
    %316 = math.exp %315 : vector<8x32xf32>
    %cst_94 = arith.constant 1.000000e+00 : f32
    %317 = vector.broadcast %cst_94 : f32 to vector<8x32xf32>
    %318 = arith.addf %317, %316 : vector<8x32xf32>
    %319 = arith.divf %317, %318 : vector<8x32xf32>
    %320 = vector.extract_strided_slice %313 {offsets = [0, 32], sizes = [8, 32], strides = [1, 1]} : vector<8x128xf32> to vector<8x32xf32>
    %321 = arith.negf %320 : vector<8x32xf32>
    %322 = math.exp %321 : vector<8x32xf32>
    %cst_95 = arith.constant 1.000000e+00 : f32
    %323 = vector.broadcast %cst_95 : f32 to vector<8x32xf32>
    %324 = arith.addf %323, %322 : vector<8x32xf32>
    %325 = arith.divf %323, %324 : vector<8x32xf32>
    %326 = vector.extract_strided_slice %313 {offsets = [0, 64], sizes = [8, 32], strides = [1, 1]} : vector<8x128xf32> to vector<8x32xf32>
    %327 = math.tanh %326 : vector<8x32xf32>
    %328 = vector.extract_strided_slice %313 {offsets = [0, 96], sizes = [8, 32], strides = [1, 1]} : vector<8x128xf32> to vector<8x32xf32>
    %329 = arith.negf %328 : vector<8x32xf32>
    %330 = math.exp %329 : vector<8x32xf32>
    %cst_96 = arith.constant 1.000000e+00 : f32
    %331 = vector.broadcast %cst_96 : f32 to vector<8x32xf32>
    %332 = arith.addf %331, %330 : vector<8x32xf32>
    %333 = arith.divf %331, %332 : vector<8x32xf32>
    %334 = arith.mulf %325, %306 : vector<8x32xf32>
    %335 = arith.mulf %319, %327 : vector<8x32xf32>
    %336 = arith.addf %334, %335 : vector<8x32xf32>
    %337 = math.tanh %336 : vector<8x32xf32>
    %338 = arith.mulf %333, %337 : vector<8x32xf32>
    %c2_i32_97 = arith.constant 2 : i32
    %c8_i32_98 = arith.constant 8 : i32
    %339 = arith.muli %c2_i32_97, %c8_i32_98 : i32
    %340 = arith.index_cast %339 : i32 to index
    %c0_99 = arith.constant 0 : index
    %341 = vector.load %arg11[%340, %c0_99] : memref<64x128xf32, #tpu.memory_space<vmem>>, vector<8x128xf32>
    %cst_100 = arith.constant dense<0.000000e+00> : vector<8x128xf32>
    %342 = tpu.matmul %338, %276, %cst_100 {dimension_numbers = #tpu.dot_dimension_numbers<[1], [0], [0], [1], [0, 0, 1, 1], [], []>} : vector<8x32xf32>, vector<32x128xf32>, vector<8x128xf32> -> vector<8x128xf32>
    %343 = arith.addf %341, %342 : vector<8x128xf32>
    %344 = vector.extract_strided_slice %343 {offsets = [0, 0], sizes = [8, 32], strides = [1, 1]} : vector<8x128xf32> to vector<8x32xf32>
    %345 = arith.negf %344 : vector<8x32xf32>
    %346 = math.exp %345 : vector<8x32xf32>
    %cst_101 = arith.constant 1.000000e+00 : f32
    %347 = vector.broadcast %cst_101 : f32 to vector<8x32xf32>
    %348 = arith.addf %347, %346 : vector<8x32xf32>
    %349 = arith.divf %347, %348 : vector<8x32xf32>
    %350 = vector.extract_strided_slice %343 {offsets = [0, 32], sizes = [8, 32], strides = [1, 1]} : vector<8x128xf32> to vector<8x32xf32>
    %351 = arith.negf %350 : vector<8x32xf32>
    %352 = math.exp %351 : vector<8x32xf32>
    %cst_102 = arith.constant 1.000000e+00 : f32
    %353 = vector.broadcast %cst_102 : f32 to vector<8x32xf32>
    %354 = arith.addf %353, %352 : vector<8x32xf32>
    %355 = arith.divf %353, %354 : vector<8x32xf32>
    %356 = vector.extract_strided_slice %343 {offsets = [0, 64], sizes = [8, 32], strides = [1, 1]} : vector<8x128xf32> to vector<8x32xf32>
    %357 = math.tanh %356 : vector<8x32xf32>
    %358 = vector.extract_strided_slice %343 {offsets = [0, 96], sizes = [8, 32], strides = [1, 1]} : vector<8x128xf32> to vector<8x32xf32>
    %359 = arith.negf %358 : vector<8x32xf32>
    %360 = math.exp %359 : vector<8x32xf32>
    %cst_103 = arith.constant 1.000000e+00 : f32
    %361 = vector.broadcast %cst_103 : f32 to vector<8x32xf32>
    %362 = arith.addf %361, %360 : vector<8x32xf32>
    %363 = arith.divf %361, %362 : vector<8x32xf32>
    %364 = arith.mulf %355, %336 : vector<8x32xf32>
    %365 = arith.mulf %349, %357 : vector<8x32xf32>
    %366 = arith.addf %364, %365 : vector<8x32xf32>
    %367 = math.tanh %366 : vector<8x32xf32>
    %368 = arith.mulf %363, %367 : vector<8x32xf32>
    %c3_i32_104 = arith.constant 3 : i32
    %c8_i32_105 = arith.constant 8 : i32
    %369 = arith.muli %c3_i32_104, %c8_i32_105 : i32
    %370 = arith.index_cast %369 : i32 to index
    %c0_106 = arith.constant 0 : index
    %371 = vector.load %arg11[%370, %c0_106] : memref<64x128xf32, #tpu.memory_space<vmem>>, vector<8x128xf32>
    %cst_107 = arith.constant dense<0.000000e+00> : vector<8x128xf32>
    %372 = tpu.matmul %368, %276, %cst_107 {dimension_numbers = #tpu.dot_dimension_numbers<[1], [0], [0], [1], [0, 0, 1, 1], [], []>} : vector<8x32xf32>, vector<32x128xf32>, vector<8x128xf32> -> vector<8x128xf32>
    %373 = arith.addf %371, %372 : vector<8x128xf32>
    %374 = vector.extract_strided_slice %373 {offsets = [0, 0], sizes = [8, 32], strides = [1, 1]} : vector<8x128xf32> to vector<8x32xf32>
    %375 = arith.negf %374 : vector<8x32xf32>
    %376 = math.exp %375 : vector<8x32xf32>
    %cst_108 = arith.constant 1.000000e+00 : f32
    %377 = vector.broadcast %cst_108 : f32 to vector<8x32xf32>
    %378 = arith.addf %377, %376 : vector<8x32xf32>
    %379 = arith.divf %377, %378 : vector<8x32xf32>
    %380 = vector.extract_strided_slice %373 {offsets = [0, 32], sizes = [8, 32], strides = [1, 1]} : vector<8x128xf32> to vector<8x32xf32>
    %381 = arith.negf %380 : vector<8x32xf32>
    %382 = math.exp %381 : vector<8x32xf32>
    %cst_109 = arith.constant 1.000000e+00 : f32
    %383 = vector.broadcast %cst_109 : f32 to vector<8x32xf32>
    %384 = arith.addf %383, %382 : vector<8x32xf32>
    %385 = arith.divf %383, %384 : vector<8x32xf32>
    %386 = vector.extract_strided_slice %373 {offsets = [0, 64], sizes = [8, 32], strides = [1, 1]} : vector<8x128xf32> to vector<8x32xf32>
    %387 = math.tanh %386 : vector<8x32xf32>
    %388 = vector.extract_strided_slice %373 {offsets = [0, 96], sizes = [8, 32], strides = [1, 1]} : vector<8x128xf32> to vector<8x32xf32>
    %389 = arith.negf %388 : vector<8x32xf32>
    %390 = math.exp %389 : vector<8x32xf32>
    %cst_110 = arith.constant 1.000000e+00 : f32
    %391 = vector.broadcast %cst_110 : f32 to vector<8x32xf32>
    %392 = arith.addf %391, %390 : vector<8x32xf32>
    %393 = arith.divf %391, %392 : vector<8x32xf32>
    %394 = arith.mulf %385, %366 : vector<8x32xf32>
    %395 = arith.mulf %379, %387 : vector<8x32xf32>
    %396 = arith.addf %394, %395 : vector<8x32xf32>
    %397 = math.tanh %396 : vector<8x32xf32>
    %398 = arith.mulf %393, %397 : vector<8x32xf32>
    %c4_i32_111 = arith.constant 4 : i32
    %c8_i32_112 = arith.constant 8 : i32
    %399 = arith.muli %c4_i32_111, %c8_i32_112 : i32
    %400 = arith.index_cast %399 : i32 to index
    %c0_113 = arith.constant 0 : index
    %401 = vector.load %arg11[%400, %c0_113] : memref<64x128xf32, #tpu.memory_space<vmem>>, vector<8x128xf32>
    %cst_114 = arith.constant dense<0.000000e+00> : vector<8x128xf32>
    %402 = tpu.matmul %398, %276, %cst_114 {dimension_numbers = #tpu.dot_dimension_numbers<[1], [0], [0], [1], [0, 0, 1, 1], [], []>} : vector<8x32xf32>, vector<32x128xf32>, vector<8x128xf32> -> vector<8x128xf32>
    %403 = arith.addf %401, %402 : vector<8x128xf32>
    %404 = vector.extract_strided_slice %403 {offsets = [0, 0], sizes = [8, 32], strides = [1, 1]} : vector<8x128xf32> to vector<8x32xf32>
    %405 = arith.negf %404 : vector<8x32xf32>
    %406 = math.exp %405 : vector<8x32xf32>
    %cst_115 = arith.constant 1.000000e+00 : f32
    %407 = vector.broadcast %cst_115 : f32 to vector<8x32xf32>
    %408 = arith.addf %407, %406 : vector<8x32xf32>
    %409 = arith.divf %407, %408 : vector<8x32xf32>
    %410 = vector.extract_strided_slice %403 {offsets = [0, 32], sizes = [8, 32], strides = [1, 1]} : vector<8x128xf32> to vector<8x32xf32>
    %411 = arith.negf %410 : vector<8x32xf32>
    %412 = math.exp %411 : vector<8x32xf32>
    %cst_116 = arith.constant 1.000000e+00 : f32
    %413 = vector.broadcast %cst_116 : f32 to vector<8x32xf32>
    %414 = arith.addf %413, %412 : vector<8x32xf32>
    %415 = arith.divf %413, %414 : vector<8x32xf32>
    %416 = vector.extract_strided_slice %403 {offsets = [0, 64], sizes = [8, 32], strides = [1, 1]} : vector<8x128xf32> to vector<8x32xf32>
    %417 = math.tanh %416 : vector<8x32xf32>
    %418 = vector.extract_strided_slice %403 {offsets = [0, 96], sizes = [8, 32], strides = [1, 1]} : vector<8x128xf32> to vector<8x32xf32>
    %419 = arith.negf %418 : vector<8x32xf32>
    %420 = math.exp %419 : vector<8x32xf32>
    %cst_117 = arith.constant 1.000000e+00 : f32
    %421 = vector.broadcast %cst_117 : f32 to vector<8x32xf32>
    %422 = arith.addf %421, %420 : vector<8x32xf32>
    %423 = arith.divf %421, %422 : vector<8x32xf32>
    %424 = arith.mulf %415, %396 : vector<8x32xf32>
    %425 = arith.mulf %409, %417 : vector<8x32xf32>
    %426 = arith.addf %424, %425 : vector<8x32xf32>
    %427 = math.tanh %426 : vector<8x32xf32>
    %428 = arith.mulf %423, %427 : vector<8x32xf32>
    %c5_i32_118 = arith.constant 5 : i32
    %c8_i32_119 = arith.constant 8 : i32
    %429 = arith.muli %c5_i32_118, %c8_i32_119 : i32
    %430 = arith.index_cast %429 : i32 to index
    %c0_120 = arith.constant 0 : index
    %431 = vector.load %arg11[%430, %c0_120] : memref<64x128xf32, #tpu.memory_space<vmem>>, vector<8x128xf32>
    %cst_121 = arith.constant dense<0.000000e+00> : vector<8x128xf32>
    %432 = tpu.matmul %428, %276, %cst_121 {dimension_numbers = #tpu.dot_dimension_numbers<[1], [0], [0], [1], [0, 0, 1, 1], [], []>} : vector<8x32xf32>, vector<32x128xf32>, vector<8x128xf32> -> vector<8x128xf32>
    %433 = arith.addf %431, %432 : vector<8x128xf32>
    %434 = vector.extract_strided_slice %433 {offsets = [0, 0], sizes = [8, 32], strides = [1, 1]} : vector<8x128xf32> to vector<8x32xf32>
    %435 = arith.negf %434 : vector<8x32xf32>
    %436 = math.exp %435 : vector<8x32xf32>
    %cst_122 = arith.constant 1.000000e+00 : f32
    %437 = vector.broadcast %cst_122 : f32 to vector<8x32xf32>
    %438 = arith.addf %437, %436 : vector<8x32xf32>
    %439 = arith.divf %437, %438 : vector<8x32xf32>
    %440 = vector.extract_strided_slice %433 {offsets = [0, 32], sizes = [8, 32], strides = [1, 1]} : vector<8x128xf32> to vector<8x32xf32>
    %441 = arith.negf %440 : vector<8x32xf32>
    %442 = math.exp %441 : vector<8x32xf32>
    %cst_123 = arith.constant 1.000000e+00 : f32
    %443 = vector.broadcast %cst_123 : f32 to vector<8x32xf32>
    %444 = arith.addf %443, %442 : vector<8x32xf32>
    %445 = arith.divf %443, %444 : vector<8x32xf32>
    %446 = vector.extract_strided_slice %433 {offsets = [0, 64], sizes = [8, 32], strides = [1, 1]} : vector<8x128xf32> to vector<8x32xf32>
    %447 = math.tanh %446 : vector<8x32xf32>
    %448 = vector.extract_strided_slice %433 {offsets = [0, 96], sizes = [8, 32], strides = [1, 1]} : vector<8x128xf32> to vector<8x32xf32>
    %449 = arith.negf %448 : vector<8x32xf32>
    %450 = math.exp %449 : vector<8x32xf32>
    %cst_124 = arith.constant 1.000000e+00 : f32
    %451 = vector.broadcast %cst_124 : f32 to vector<8x32xf32>
    %452 = arith.addf %451, %450 : vector<8x32xf32>
    %453 = arith.divf %451, %452 : vector<8x32xf32>
    %454 = arith.mulf %445, %426 : vector<8x32xf32>
    %455 = arith.mulf %439, %447 : vector<8x32xf32>
    %456 = arith.addf %454, %455 : vector<8x32xf32>
    %457 = math.tanh %456 : vector<8x32xf32>
    %458 = arith.mulf %453, %457 : vector<8x32xf32>
    %c6_i32_125 = arith.constant 6 : i32
    %c8_i32_126 = arith.constant 8 : i32
    %459 = arith.muli %c6_i32_125, %c8_i32_126 : i32
    %460 = arith.index_cast %459 : i32 to index
    %c0_127 = arith.constant 0 : index
    %461 = vector.load %arg11[%460, %c0_127] : memref<64x128xf32, #tpu.memory_space<vmem>>, vector<8x128xf32>
    %cst_128 = arith.constant dense<0.000000e+00> : vector<8x128xf32>
    %462 = tpu.matmul %458, %276, %cst_128 {dimension_numbers = #tpu.dot_dimension_numbers<[1], [0], [0], [1], [0, 0, 1, 1], [], []>} : vector<8x32xf32>, vector<32x128xf32>, vector<8x128xf32> -> vector<8x128xf32>
    %463 = arith.addf %461, %462 : vector<8x128xf32>
    %464 = vector.extract_strided_slice %463 {offsets = [0, 0], sizes = [8, 32], strides = [1, 1]} : vector<8x128xf32> to vector<8x32xf32>
    %465 = arith.negf %464 : vector<8x32xf32>
    %466 = math.exp %465 : vector<8x32xf32>
    %cst_129 = arith.constant 1.000000e+00 : f32
    %467 = vector.broadcast %cst_129 : f32 to vector<8x32xf32>
    %468 = arith.addf %467, %466 : vector<8x32xf32>
    %469 = arith.divf %467, %468 : vector<8x32xf32>
    %470 = vector.extract_strided_slice %463 {offsets = [0, 32], sizes = [8, 32], strides = [1, 1]} : vector<8x128xf32> to vector<8x32xf32>
    %471 = arith.negf %470 : vector<8x32xf32>
    %472 = math.exp %471 : vector<8x32xf32>
    %cst_130 = arith.constant 1.000000e+00 : f32
    %473 = vector.broadcast %cst_130 : f32 to vector<8x32xf32>
    %474 = arith.addf %473, %472 : vector<8x32xf32>
    %475 = arith.divf %473, %474 : vector<8x32xf32>
    %476 = vector.extract_strided_slice %463 {offsets = [0, 64], sizes = [8, 32], strides = [1, 1]} : vector<8x128xf32> to vector<8x32xf32>
    %477 = math.tanh %476 : vector<8x32xf32>
    %478 = vector.extract_strided_slice %463 {offsets = [0, 96], sizes = [8, 32], strides = [1, 1]} : vector<8x128xf32> to vector<8x32xf32>
    %479 = arith.negf %478 : vector<8x32xf32>
    %480 = math.exp %479 : vector<8x32xf32>
    %cst_131 = arith.constant 1.000000e+00 : f32
    %481 = vector.broadcast %cst_131 : f32 to vector<8x32xf32>
    %482 = arith.addf %481, %480 : vector<8x32xf32>
    %483 = arith.divf %481, %482 : vector<8x32xf32>
    %484 = arith.mulf %475, %456 : vector<8x32xf32>
    %485 = arith.mulf %469, %477 : vector<8x32xf32>
    %486 = arith.addf %484, %485 : vector<8x32xf32>
    %487 = math.tanh %486 : vector<8x32xf32>
    %488 = arith.mulf %483, %487 : vector<8x32xf32>
    %c7_i32_132 = arith.constant 7 : i32
    %c8_i32_133 = arith.constant 8 : i32
    %489 = arith.muli %c7_i32_132, %c8_i32_133 : i32
    %490 = arith.index_cast %489 : i32 to index
    %c0_134 = arith.constant 0 : index
    %491 = vector.load %arg11[%490, %c0_134] : memref<64x128xf32, #tpu.memory_space<vmem>>, vector<8x128xf32>
    %cst_135 = arith.constant dense<0.000000e+00> : vector<8x128xf32>
    %492 = tpu.matmul %488, %276, %cst_135 {dimension_numbers = #tpu.dot_dimension_numbers<[1], [0], [0], [1], [0, 0, 1, 1], [], []>} : vector<8x32xf32>, vector<32x128xf32>, vector<8x128xf32> -> vector<8x128xf32>
    %493 = arith.addf %491, %492 : vector<8x128xf32>
    %494 = vector.extract_strided_slice %493 {offsets = [0, 0], sizes = [8, 32], strides = [1, 1]} : vector<8x128xf32> to vector<8x32xf32>
    %495 = arith.negf %494 : vector<8x32xf32>
    %496 = math.exp %495 : vector<8x32xf32>
    %cst_136 = arith.constant 1.000000e+00 : f32
    %497 = vector.broadcast %cst_136 : f32 to vector<8x32xf32>
    %498 = arith.addf %497, %496 : vector<8x32xf32>
    %499 = arith.divf %497, %498 : vector<8x32xf32>
    %500 = vector.extract_strided_slice %493 {offsets = [0, 32], sizes = [8, 32], strides = [1, 1]} : vector<8x128xf32> to vector<8x32xf32>
    %501 = arith.negf %500 : vector<8x32xf32>
    %502 = math.exp %501 : vector<8x32xf32>
    %cst_137 = arith.constant 1.000000e+00 : f32
    %503 = vector.broadcast %cst_137 : f32 to vector<8x32xf32>
    %504 = arith.addf %503, %502 : vector<8x32xf32>
    %505 = arith.divf %503, %504 : vector<8x32xf32>
    %506 = vector.extract_strided_slice %493 {offsets = [0, 64], sizes = [8, 32], strides = [1, 1]} : vector<8x128xf32> to vector<8x32xf32>
    %507 = math.tanh %506 : vector<8x32xf32>
    %508 = vector.extract_strided_slice %493 {offsets = [0, 96], sizes = [8, 32], strides = [1, 1]} : vector<8x128xf32> to vector<8x32xf32>
    %509 = arith.negf %508 : vector<8x32xf32>
    %510 = math.exp %509 : vector<8x32xf32>
    %cst_138 = arith.constant 1.000000e+00 : f32
    %511 = vector.broadcast %cst_138 : f32 to vector<8x32xf32>
    %512 = arith.addf %511, %510 : vector<8x32xf32>
    %513 = arith.divf %511, %512 : vector<8x32xf32>
    %514 = arith.mulf %505, %486 : vector<8x32xf32>
    %515 = arith.mulf %499, %507 : vector<8x32xf32>
    %516 = arith.addf %514, %515 : vector<8x32xf32>
    %517 = math.tanh %516 : vector<8x32xf32>
    %518 = arith.mulf %513, %517 : vector<8x32xf32>
    %c8_i32_139 = arith.constant 8 : i32
    %c1 = arith.constant 1 : index
    %c0_140 = arith.constant 0 : index
    %c0_141 = arith.constant 0 : index
    %519 = vector.load %arg10[%c1, %c0_140, %c0_141] : memref<2x8x32xf32, #tpu.memory_space<vmem>>, vector<1x8x32xf32>
    %520 = vector.shape_cast %519 : vector<1x8x32xf32> to vector<8x32xf32>
    %521 = vector.shape_cast %518 : vector<8x32xf32> to vector<1x8x32xf32>
    tpu.vector_store %arg10[%c1, %c0_140, %c0_141], %521 {strides = array<i32>} : memref<2x8x32xf32, #tpu.memory_space<vmem>>, vector<1x8x32xf32>,
    %c0_142 = arith.constant 0 : index
    %c0_143 = arith.constant 0 : index
    %522 = vector.load %arg7[%c0_142, %c0_143] : memref<32x8xf32, #tpu.memory_space<vmem>>, vector<32x8xf32>
    %cst_144 = arith.constant dense<0.000000e+00> : vector<8x8xf32>
    %523 = tpu.matmul %518, %522, %cst_144 {dimension_numbers = #tpu.dot_dimension_numbers<[1], [0], [0], [1], [0, 0, 1, 1], [], []>} : vector<8x32xf32>, vector<32x8xf32>, vector<8x8xf32> -> vector<8x8xf32>
    %c0_145 = arith.constant 0 : index
    %c0_146 = arith.constant 0 : index
    %524 = vector.load %arg8[%c0_145, %c0_146] : memref<1x8xf32, #tpu.memory_space<vmem>>, vector<1x8xf32>
    %525 = vector.broadcast %524 : vector<1x8xf32> to vector<8x8xf32>
    %526 = arith.addf %523, %525 : vector<8x8xf32>
    %c0_147 = arith.constant 0 : index
    %c0_148 = arith.constant 0 : index
    %527 = vector.load %arg9[%c0_147, %c0_148] : memref<8x8xf32, #tpu.memory_space<vmem>>, vector<8x8xf32>
    tpu.vector_store %arg9[%c0_147, %c0_148], %526 {strides = array<i32>} : memref<8x8xf32, #tpu.memory_space<vmem>>, vector<8x8xf32>,
    return
  }
}

</mosaic_0001>

<llo_original>
// kernel: tpu_custom_call.1
$region0: #{tpu_custom_call.1}
  #allocation0 [shape = 'u32[]', space=smem, size = 0x4, offset = 0x4, fixed_abs, tag = 'smem constant byte address 0x4 - core index']
  #allocation1 [shape = 'u32[144,128]{1,0:T(1,128)}', space=vmem, size = 0x12000, scoped, tag = 'internal scratch']
  #allocation2 [shape = 'f32[64,128]{1,0:T(8,128)}', space=vmem, size = 0x8000, scoped, tag = 'scratch operand']
  #allocation3 [shape = 'f32[64,32]{1,0:T(8,128)}', space=vmem, size = 0x8000, scoped, tag = 'scratch operand']
  %s0 = inlined_call_operand.vmem [shape: f32[64,16], index: 0, kind: input, shape index: {}]
  %s1 = inlined_call_operand.vmem [shape: f32[16,128], index: 1, kind: input, shape index: {}]
  %s2 = inlined_call_operand.vmem [shape: f32[32,128], index: 2, kind: input, shape index: {}]
  %s3 = inlined_call_operand.vmem [shape: f32[1,128], index: 3, kind: input, shape index: {}]
  %s4 = inlined_call_operand.vmem [shape: f32[32,128], index: 4, kind: input, shape index: {}]
  %s5 = inlined_call_operand.vmem [shape: f32[32,128], index: 5, kind: input, shape index: {}]
  %s6 = inlined_call_operand.vmem [shape: f32[1,128], index: 6, kind: input, shape index: {}]
  %s7 = inlined_call_operand.vmem [shape: f32[32,8], index: 7, kind: input, shape index: {}]
  %s8 = inlined_call_operand.vmem [shape: f32[1,8], index: 8, kind: input, shape index: {}]
  %s9 = inlined_call_operand.hbm [shape: f32[8,8], index: 9, kind: output, shape index: {0}]
  %s10 = inlined_call_operand.hbm [shape: f32[2,8,32], index: 10, kind: output, shape index: {1}]
  %11 = xla_tuple %s9, %s10
  %s12 = sld [smem:[#allocation0]]
  $region54: #{tpu_custom_call.1} parent=0
    _
  %s14 = ssub.s32 1, %s12
  %s15 = scalar_select 0, %s14, %s12
  $region1: #{tpu_custom_call.1} parent=0
    #allocation4 [shape = 'u8[4096]{0}', space=vmem, size = 0x1000, scoped, tag = 'output window, operand 0, single buffered']
    #allocation5 [shape = 's32[1]{0}', space=sflag, size = 0x4, scoped, tag = 'scoped memory for tpu_custom_call.1']
    #allocation6 [shape = 'u8[8192]{0}', space=vmem, size = 0x2000, scoped, tag = 'output window, operand 1, single buffered']
    #allocation7 [shape = 's32[1]{0}', space=sflag, size = 0x4, scoped, tag = 'scoped memory for tpu_custom_call.1']
    %16 = vsyncpa [#allocation5], 0
    %17 = vsyncpa [#allocation7], 0
    // Predicated region
    $region2: #{tpu_custom_call.1} parent=1 // pred_check
      _
    $region3: #{tpu_custom_call.1} parent=1 // pred_check_branch
      %19 = sbr.rel (0) target = $region5
    $region4: #{tpu_custom_call.1} parent=1 // pred_region
      _
    $region5: #{tpu_custom_call.1} parent=1 // pred_fallthru
      _
    // Predicated region
    $region6: #{tpu_custom_call.1} parent=1 // pred_check
      _
    $region7: #{tpu_custom_call.1} parent=1 // pred_check_branch
      %21 = sbr.rel (0) target = $region9
    $region8: #{tpu_custom_call.1} parent=1 // pred_region
      _
    $region9: #{tpu_custom_call.1} parent=1 // pred_fallthru
      _
    // Predicated region
    $region10: #{tpu_custom_call.1} parent=1 // pred_check
      _
    $region11: #{tpu_custom_call.1} parent=1 // pred_check_branch
      %23 = sbr.rel (0) target = $region13
    $region12: #{tpu_custom_call.1} parent=1 // pred_region
      _
    $region13: #{tpu_custom_call.1} parent=1 // pred_fallthru
      _
    // Predicated region
    $region14: #{tpu_custom_call.1} parent=1 // pred_check
      _
    $region15: #{tpu_custom_call.1} parent=1 // pred_check_branch
      %25 = sbr.rel (0) target = $region17
    $region16: #{tpu_custom_call.1} parent=1 // pred_region
      _
    $region17: #{tpu_custom_call.1} parent=1 // pred_fallthru
      _
    // Predicated region
    $region18: #{tpu_custom_call.1} parent=1 // pred_check
      _
    $region19: #{tpu_custom_call.1} parent=1 // pred_check_branch
      %27 = sbr.rel (0) target = $region21
    $region20: #{tpu_custom_call.1} parent=1 // pred_region
      _
    $region21: #{tpu_custom_call.1} parent=1 // pred_fallthru
      _
    // Predicated region
    $region22: #{tpu_custom_call.1} parent=1 // pred_check
      _
    $region23: #{tpu_custom_call.1} parent=1 // pred_check_branch
      %29 = sbr.rel (0) target = $region25
    $region24: #{tpu_custom_call.1} parent=1 // pred_region
      _
    $region25: #{tpu_custom_call.1} parent=1 // pred_fallthru
      _
    // Predicated region
    $region26: #{tpu_custom_call.1} parent=1 // pred_check
      _
    $region27: #{tpu_custom_call.1} parent=1 // pred_check_branch
      %31 = sbr.rel (0) target = $region29
    $region28: #{tpu_custom_call.1} parent=1 // pred_region
      _
    $region29: #{tpu_custom_call.1} parent=1 // pred_fallthru
      _
    // Predicated region
    $region30: #{tpu_custom_call.1} parent=1 // pred_check
      _
    $region31: #{tpu_custom_call.1} parent=1 // pred_check_branch
      %33 = sbr.rel (0) target = $region33
    $region32: #{tpu_custom_call.1} parent=1 // pred_region
      _
    $region33: #{tpu_custom_call.1} parent=1 // pred_fallthru
      _
    // Predicated region
    $region34: #{tpu_custom_call.1} parent=1 // pred_check
      _
    $region35: #{tpu_custom_call.1} parent=1 // pred_check_branch
      %35 = sbr.rel (0) target = $region37
    $region36: #{tpu_custom_call.1} parent=1 // pred_region
      _
    $region37: #{tpu_custom_call.1} parent=1 // pred_fallthru
      _
    %v36 = vld [vmem:[%s0] sm:$0xff]
    %v37 = vld [vmem:[%s0 + $0x8] sm:$0xff]
    %v38 = vld [vmem:[%s0 + $0x10] sm:$0xff]
    %v39 = vld [vmem:[%s0 + $0x18] sm:$0xff]
    %v40 = vld [vmem:[%s0 + $0x20] sm:$0xff]
    %v41 = vld [vmem:[%s0 + $0x28] sm:$0xff]
    %v42 = vld [vmem:[%s0 + $0x30] sm:$0xff]
    %v43 = vld [vmem:[%s0 + $0x38] sm:$0xff]
    %v44 = vld [vmem:[%s1] sm:$0xff]
    %v45 = vld [vmem:[%s1 + $0x8] sm:$0xff]
    %v46 = vld [vmem:[%s3] sm:$0x1]
    %v48 = vlaneseq
    %v49 = vshrl.u32 %v48, 7
    %v50 = vsub.s32 0, %v49
    %v51 = vrot.slane %v46, %v50
    %vm53 = vcmask 130048
    %v55 = vsel %vm53, %v36, 0
    %v58 = vsel %vm53, %v37, 0
    %v61 = vsel %vm53, %v38, 0
    %v64 = vsel %vm53, %v39, 0
    %v67 = vsel %vm53, %v40, 0
    %v70 = vsel %vm53, %v41, 0
    %v73 = vsel %vm53, %v42, 0
    %v76 = vsel %vm53, %v43, 0
    %78 = vmatprep.subr.mxu0 0.0
    %79 = vmatpush1.msra.mxu0 %v44
    %80 = vmatprep.subr.mxu0 0.0
    %81 = vmatpush1.msra.mxu0 %v45
    %82 = vmatprep.subr.mxu0 0.0
    %83 = vmatpush1.msra.mxu0 0.0
    %84 = vmatprep.subr.mxu0 0.0
    %85 = vmatpush1.msra.mxu0 0.0
    %86 = vmatprep.subr.mxu0 0.0
    %87 = vmatpush1.msra.mxu0 0.0
    %88 = vmatprep.subr.mxu0 0.0
    %89 = vmatpush1.msra.mxu0 0.0
    %90 = vmatprep.subr.mxu0 0.0
    %91 = vmatpush1.msra.mxu0 0.0
    %92 = vmatprep.subr.mxu0 0.0
    %93 = vmatpush1.msra.mxu0 0.0
    %94 = vmatprep.subr.mxu0 0.0
    %95 = vmatpush1.msra.mxu0 0.0
    %96 = vmatprep.subr.mxu0 0.0
    %97 = vmatpush1.msra.mxu0 0.0
    %98 = vmatprep.subr.mxu0 0.0
    %99 = vmatpush1.msra.mxu0 0.0
    %100 = vmatprep.subr.mxu0 0.0
    %101 = vmatpush1.msra.mxu0 0.0
    %102 = vmatprep.subr.mxu0 0.0
    %103 = vmatpush1.msra.mxu0 0.0
    %104 = vmatprep.subr.mxu0 0.0
    %105 = vmatpush1.msra.mxu0 0.0
    %106 = vmatprep.subr.mxu0 0.0
    %107 = vmatpush1.msra.mxu0 0.0
    %108 = vmatprep.subr.mxu0 0.0
    %109 = vmatpush1.msra.mxu0 0.0
    %110 = vmatprep.subr.mxu0 0.0
    %111 = vmatpush1.msra.mxu0 0.0
    %112 = vmatprep.subr.mxu0 0.0
    %113 = vmatpush1.msra.mxu0 0.0
    %114 = vmatprep.subr.mxu0 0.0
    %115 = vmatpush1.msra.mxu0 0.0
    %116 = vmatprep.subr.mxu0 0.0
    %117 = vmatpush1.msra.mxu0 0.0
    %118 = vmatprep.subr.mxu0 0.0
    %119 = vmatpush1.msra.mxu0 0.0
    %120 = vmatprep.subr.mxu0 0.0
    %121 = vmatpush1.msra.mxu0 0.0
    %122 = vmatprep.subr.mxu0 0.0
    %123 = vmatpush1.msra.mxu0 0.0
    %124 = vmatprep.subr.mxu0 0.0
    %125 = vmatpush1.msra.mxu0 0.0
    %126 = vmatprep.subr.mxu0 0.0
    %127 = vmatpush1.msra.mxu0 0.0
    %128 = vmatprep.subr.mxu0 0.0
    %129 = vmatpush1.msra.mxu0 0.0
    %130 = vmatprep.subr.mxu0 0.0
    %131 = vmatpush1.msra.mxu0 0.0
    %132 = vmatprep.subr.mxu0 0.0
    %133 = vmatpush1.msra.mxu0 0.0
    %134 = vmatprep.subr.mxu0 0.0
    %135 = vmatpush1.msra.mxu0 0.0
    %136 = vmatprep.subr.mxu0 0.0
    %137 = vmatpush1.msra.mxu0 0.0
    %138 = vmatprep.subr.mxu0 0.0
    %139 = vmatpush1.msra.mxu0 0.0
    %140 = vmatprep.subr.mxu0 0.0
    %141 = vmatpush1.msra.mxu0 0.0
    %142 = vmatprep.mubr.f32.mxu0 0.0
    %143 = vmatmul.mubr.f32.gmra.mrb[0].mxu0 %v55
    %v144 = vpop.f32.mrb[0].mxu0
    %v145 = vadd.f32 %v51, %v144
    %v146 = vpop.f32.mrb[0].mxu0
    %147 = vmatprep.mubr.f32.mxu0 0.0
    %148 = vmatmul.mubr.f32.gmra.mrb[0].mxu0 %v58
    %v149 = vpop.f32.mrb[0].mxu0
    %v150 = vadd.f32 %v51, %v149
    %v151 = vpop.f32.mrb[0].mxu0
    %152 = vmatprep.mubr.f32.mxu0 0.0
    %153 = vmatmul.mubr.f32.gmra.mrb[0].mxu0 %v61
    %v154 = vpop.f32.mrb[0].mxu0
    %v155 = vadd.f32 %v51, %v154
    %v156 = vpop.f32.mrb[0].mxu0
    %157 = vmatprep.mubr.f32.mxu0 0.0
    %158 = vmatmul.mubr.f32.gmra.mrb[0].mxu0 %v64
    %v159 = vpop.f32.mrb[0].mxu0
    %v160 = vadd.f32 %v51, %v159
    %v161 = vpop.f32.mrb[0].mxu0
    %162 = vmatprep.mubr.f32.mxu0 0.0
    %163 = vmatmul.mubr.f32.gmra.mrb[0].mxu0 %v67
    %v164 = vpop.f32.mrb[0].mxu0
    %v165 = vadd.f32 %v51, %v164
    %v166 = vpop.f32.mrb[0].mxu0
    %167 = vmatprep.mubr.f32.mxu0 0.0
    %168 = vmatmul.mubr.f32.gmra.mrb[0].mxu0 %v70
    %v169 = vpop.f32.mrb[0].mxu0
    %v170 = vadd.f32 %v51, %v169
    %v171 = vpop.f32.mrb[0].mxu0
    %172 = vmatprep.mubr.f32.mxu0 0.0
    %173 = vmatmul.mubr.f32.gmra.mrb[0].mxu0 %v73
    %v174 = vpop.f32.mrb[0].mxu0
    %v175 = vadd.f32 %v51, %v174
    %v176 = vpop.f32.mrb[0].mxu0
    %177 = vmatprep.mubr.f32.mxu0 0.0
    %178 = vmatmul.mubr.f32.gmra.mrb[0].mxu0 %v76
    %v179 = vpop.f32.mrb[0].mxu0
    %v180 = vadd.f32 %v51, %v179
    %v181 = vpop.f32.mrb[0].mxu0
    %182 = vdwg.mxu0
    %183 = vst [vmem:[#allocation2] sm:$0xff] %v145
    %184 = vst [vmem:[#allocation2 + $0x8] sm:$0xff] %v150
    %185 = vst [vmem:[#allocation2 + $0x10] sm:$0xff] %v155
    %186 = vst [vmem:[#allocation2 + $0x18] sm:$0xff] %v160
    %187 = vst [vmem:[#allocation2 + $0x20] sm:$0xff] %v165
    %188 = vst [vmem:[#allocation2 + $0x28] sm:$0xff] %v170
    %189 = vst [vmem:[#allocation2 + $0x30] sm:$0xff] %v175
    %190 = vst [vmem:[#allocation2 + $0x38] sm:$0xff] %v180
    %v191 = vld [vmem:[%s2] sm:$0xff]
    %v192 = vld [vmem:[%s2 + $0x8] sm:$0xff]
    %v193 = vld [vmem:[%s2 + $0x10] sm:$0xff]
    %v194 = vld [vmem:[%s2 + $0x18] sm:$0xff]
    %v195 = vld [vmem:[#allocation2] sm:$0xff]
    %vm196 = vcmask 261120
    %v198 = vsel %vm196, 0.0, 0
    %200 = vmatprep.subr.mxu0 0.0
    %201 = vmatpush1.msra.mxu0 %v191
    %202 = vmatprep.subr.mxu0 0.0
    %203 = vmatpush1.msra.mxu0 %v192
    %204 = vmatprep.subr.mxu0 0.0
    %205 = vmatpush1.msra.mxu0 %v193
    %206 = vmatprep.subr.mxu0 0.0
    %207 = vmatpush1.msra.mxu0 %v194
    %208 = vmatprep.subr.mxu0 0.0
    %209 = vmatpush1.msra.mxu0 0.0
    %210 = vmatprep.subr.mxu0 0.0
    %211 = vmatpush1.msra.mxu0 0.0
    %212 = vmatprep.subr.mxu0 0.0
    %213 = vmatpush1.msra.mxu0 0.0
    %214 = vmatprep.subr.mxu0 0.0
    %215 = vmatpush1.msra.mxu0 0.0
    %216 = vmatprep.subr.mxu0 0.0
    %217 = vmatpush1.msra.mxu0 0.0
    %218 = vmatprep.subr.mxu0 0.0
    %219 = vmatpush1.msra.mxu0 0.0
    %220 = vmatprep.subr.mxu0 0.0
    %221 = vmatpush1.msra.mxu0 0.0
    %222 = vmatprep.subr.mxu0 0.0
    %223 = vmatpush1.msra.mxu0 0.0
    %224 = vmatprep.subr.mxu0 0.0
    %225 = vmatpush1.msra.mxu0 0.0
    %226 = vmatprep.subr.mxu0 0.0
    %227 = vmatpush1.msra.mxu0 0.0
    %228 = vmatprep.subr.mxu0 0.0
    %229 = vmatpush1.msra.mxu0 0.0
    %230 = vmatprep.subr.mxu0 0.0
    %231 = vmatpush1.msra.mxu0 0.0
    %232 = vmatprep.subr.mxu0 0.0
    %233 = vmatpush1.msra.mxu0 0.0
    %234 = vmatprep.subr.mxu0 0.0
    %235 = vmatpush1.msra.mxu0 0.0
    %236 = vmatprep.subr.mxu0 0.0
    %237 = vmatpush1.msra.mxu0 0.0
    %238 = vmatprep.subr.mxu0 0.0
    %239 = vmatpush1.msra.mxu0 0.0
    %240 = vmatprep.subr.mxu0 0.0
    %241 = vmatpush1.msra.mxu0 0.0
    %242 = vmatprep.subr.mxu0 0.0
    %243 = vmatpush1.msra.mxu0 0.0
    %244 = vmatprep.subr.mxu0 0.0
    %245 = vmatpush1.msra.mxu0 0.0
    %246 = vmatprep.subr.mxu0 0.0
    %247 = vmatpush1.msra.mxu0 0.0
    %248 = vmatprep.subr.mxu0 0.0
    %249 = vmatpush1.msra.mxu0 0.0
    %250 = vmatprep.subr.mxu0 0.0
    %251 = vmatpush1.msra.mxu0 0.0
    %252 = vmatprep.subr.mxu0 0.0
    %253 = vmatpush1.msra.mxu0 0.0
    %254 = vmatprep.subr.mxu0 0.0
    %255 = vmatpush1.msra.mxu0 0.0
    %256 = vmatprep.subr.mxu0 0.0
    %257 = vmatpush1.msra.mxu0 0.0
    %258 = vmatprep.subr.mxu0 0.0
    %259 = vmatpush1.msra.mxu0 0.0
    %260 = vmatprep.subr.mxu0 0.0
    %261 = vmatpush1.msra.mxu0 0.0
    %262 = vmatprep.subr.mxu0 0.0
    %263 = vmatpush1.msra.mxu0 0.0
    %264 = vmatprep.mubr.f32.mxu0 0.0
    %265 = vmatmul.mubr.f32.gmra.mrb[0].mxu0 %v198
    %v266 = vpop.f32.mrb[0].mxu0
    %v267 = vadd.f32 0.0, %v266
    %v268 = vpop.f32.mrb[0].mxu0
    %269 = vdwg.mxu0
    %v270 = vadd.f32 %v195, %v267
    %v271 = vxor.u32 %v270, 2147483648
    %v272 = vmul.f32 %v271, 1.442695
    %v273 = vpow.pop %v272
    %v274 = vadd.f32 %v273, 1.0
    %v275 = vrcp.pop %v274
    %v276 = vmul.f32 1.0, %v275
    %v277 = vtanh.pop %v270
    %v278 = vmul.f32 %v276, 0.0
    %280 = vrot.lane.b32.xlu0 %v277, 64
    %v281 = vpop.permute.xlu0 %280
    %v283 = vmul.f32 %v276, %v281
    %285 = vrot.lane.b32.xlu0 %v283, 32
    %v286 = vpop.permute.xlu0 %285
    %v288 = vadd.f32 %v278, %v286
    %v289 = vtanh.pop %v288
    %291 = vrot.lane.b32.xlu0 %v289, 64
    %v292 = vpop.permute.xlu0 %291
    %v294 = vmul.f32 %v276, %v292
    %296 = vrot.lane.b32.xlu0 %v294, 32
    %v297 = vpop.permute.xlu0 %296
    %299 = vst.msk [vmem:[#allocation3] sm:$0xff] %vm196, %v297
    %v300 = vld [vmem:[#allocation2 + $0x8] sm:$0xff]
    %v301 = vsel %vm196, %v297, 0
    %303 = vmatprep.subr.mxu0 0.0
    %304 = vmatpush1.msra.mxu0 %v191
    %305 = vmatprep.subr.mxu0 0.0
    %306 = vmatpush1.msra.mxu0 %v192
    %307 = vmatprep.subr.mxu0 0.0
    %308 = vmatpush1.msra.mxu0 %v193
    %309 = vmatprep.subr.mxu0 0.0
    %310 = vmatpush1.msra.mxu0 %v194
    %311 = vmatprep.subr.mxu0 0.0
    %312 = vmatpush1.msra.mxu0 0.0
    %313 = vmatprep.subr.mxu0 0.0
    %314 = vmatpush1.msra.mxu0 0.0
    %315 = vmatprep.subr.mxu0 0.0
    %316 = vmatpush1.msra.mxu0 0.0
    %317 = vmatprep.subr.mxu0 0.0
    %318 = vmatpush1.msra.mxu0 0.0
    %319 = vmatprep.subr.mxu0 0.0
    %320 = vmatpush1.msra.mxu0 0.0
    %321 = vmatprep.subr.mxu0 0.0
    %322 = vmatpush1.msra.mxu0 0.0
    %323 = vmatprep.subr.mxu0 0.0
    %324 = vmatpush1.msra.mxu0 0.0
    %325 = vmatprep.subr.mxu0 0.0
    %326 = vmatpush1.msra.mxu0 0.0
    %327 = vmatprep.subr.mxu0 0.0
    %328 = vmatpush1.msra.mxu0 0.0
    %329 = vmatprep.subr.mxu0 0.0
    %330 = vmatpush1.msra.mxu0 0.0
    %331 = vmatprep.subr.mxu0 0.0
    %332 = vmatpush1.msra.mxu0 0.0
    %333 = vmatprep.subr.mxu0 0.0
    %334 = vmatpush1.msra.mxu0 0.0
    %335 = vmatprep.subr.mxu0 0.0
    %336 = vmatpush1.msra.mxu0 0.0
    %337 = vmatprep.subr.mxu0 0.0
    %338 = vmatpush1.msra.mxu0 0.0
    %339 = vmatprep.subr.mxu0 0.0
    %340 = vmatpush1.msra.mxu0 0.0
    %341 = vmatprep.subr.mxu0 0.0
    %342 = vmatpush1.msra.mxu0 0.0
    %343 = vmatprep.subr.mxu0 0.0
    %344 = vmatpush1.msra.mxu0 0.0
    %345 = vmatprep.subr.mxu0 0.0
    %346 = vmatpush1.msra.mxu0 0.0
    %347 = vmatprep.subr.mxu0 0.0
    %348 = vmatpush1.msra.mxu0 0.0
    %349 = vmatprep.subr.mxu0 0.0
    %350 = vmatpush1.msra.mxu0 0.0
    %351 = vmatprep.subr.mxu0 0.0
    %352 = vmatpush1.msra.mxu0 0.0
    %353 = vmatprep.subr.mxu0 0.0
    %354 = vmatpush1.msra.mxu0 0.0
    %355 = vmatprep.subr.mxu0 0.0
    %356 = vmatpush1.msra.mxu0 0.0
    %357 = vmatprep.subr.mxu0 0.0
    %358 = vmatpush1.msra.mxu0 0.0
    %359 = vmatprep.subr.mxu0 0.0
    %360 = vmatpush1.msra.mxu0 0.0
    %361 = vmatprep.subr.mxu0 0.0
    %362 = vmatpush1.msra.mxu0 0.0
    %363 = vmatprep.subr.mxu0 0.0
    %364 = vmatpush1.msra.mxu0 0.0
    %365 = vmatprep.subr.mxu0 0.0
    %366 = vmatpush1.msra.mxu0 0.0
    %367 = vmatprep.mubr.f32.mxu0 0.0
    %368 = vmatmul.mubr.f32.gmra.mrb[0].mxu0 %v301
    %v369 = vpop.f32.mrb[0].mxu0
    %v370 = vadd.f32 0.0, %v369
    %v371 = vpop.f32.mrb[0].mxu0
    %372 = vdwg.mxu0
    %v373 = vadd.f32 %v300, %v370
    %v374 = vxor.u32 %v373, 2147483648
    %v375 = vmul.f32 %v374, 1.442695
    %v376 = vpow.pop %v375
    %v377 = vadd.f32 %v376, 1.0
    %v378 = vrcp.pop %v377
    %v379 = vmul.f32 1.0, %v378
    %v380 = vtanh.pop %v373
    %v381 = vmul.f32 %v379, %v288
    %383 = vrot.lane.b32.xlu0 %v380, 64
    %v384 = vpop.permute.xlu0 %383
    %v386 = vmul.f32 %v379, %v384
    %388 = vrot.lane.b32.xlu0 %v386, 32
    %v389 = vpop.permute.xlu0 %388
    %v391 = vadd.f32 %v381, %v389
    %v392 = vtanh.pop %v391
    %394 = vrot.lane.b32.xlu0 %v392, 64
    %v395 = vpop.permute.xlu0 %394
    %v397 = vmul.f32 %v379, %v395
    %399 = vrot.lane.b32.xlu0 %v397, 32
    %v400 = vpop.permute.xlu0 %399
    %402 = vst.msk [vmem:[#allocation3 + $0x8] sm:$0xff] %vm196, %v400
    %v403 = vld [vmem:[#allocation2 + $0x10] sm:$0xff]
    %v404 = vsel %vm196, %v400, 0
    %406 = vmatprep.subr.mxu0 0.0
    %407 = vmatpush1.msra.mxu0 %v191
    %408 = vmatprep.subr.mxu0 0.0
    %409 = vmatpush1.msra.mxu0 %v192
    %410 = vmatprep.subr.mxu0 0.0
    %411 = vmatpush1.msra.mxu0 %v193
    %412 = vmatprep.subr.mxu0 0.0
    %413 = vmatpush1.msra.mxu0 %v194
    %414 = vmatprep.subr.mxu0 0.0
    %415 = vmatpush1.msra.mxu0 0.0
    %416 = vmatprep.subr.mxu0 0.0
    %417 = vmatpush1.msra.mxu0 0.0
    %418 = vmatprep.subr.mxu0 0.0
    %419 = vmatpush1.msra.mxu0 0.0
    %420 = vmatprep.subr.mxu0 0.0
    %421 = vmatpush1.msra.mxu0 0.0
    %422 = vmatprep.subr.mxu0 0.0
    %423 = vmatpush1.msra.mxu0 0.0
    %424 = vmatprep.subr.mxu0 0.0
    %425 = vmatpush1.msra.mxu0 0.0
    %426 = vmatprep.subr.mxu0 0.0
    %427 = vmatpush1.msra.mxu0 0.0
    %428 = vmatprep.subr.mxu0 0.0
    %429 = vmatpush1.msra.mxu0 0.0
    %430 = vmatprep.subr.mxu0 0.0
    %431 = vmatpush1.msra.mxu0 0.0
    %432 = vmatprep.subr.mxu0 0.0
    %433 = vmatpush1.msra.mxu0 0.0
    %434 = vmatprep.subr.mxu0 0.0
    %435 = vmatpush1.msra.mxu0 0.0
    %436 = vmatprep.subr.mxu0 0.0
    %437 = vmatpush1.msra.mxu0 0.0
    %438 = vmatprep.subr.mxu0 0.0
    %439 = vmatpush1.msra.mxu0 0.0
    %440 = vmatprep.subr.mxu0 0.0
    %441 = vmatpush1.msra.mxu0 0.0
    %442 = vmatprep.subr.mxu0 0.0
    %443 = vmatpush1.msra.mxu0 0.0
    %444 = vmatprep.subr.mxu0 0.0
    %445 = vmatpush1.msra.mxu0 0.0
    %446 = vmatprep.subr.mxu0 0.0
    %447 = vmatpush1.msra.mxu0 0.0
    %448 = vmatprep.subr.mxu0 0.0
    %449 = vmatpush1.msra.mxu0 0.0
    %450 = vmatprep.subr.mxu0 0.0
    %451 = vmatpush1.msra.mxu0 0.0
    %452 = vmatprep.subr.mxu0 0.0
    %453 = vmatpush1.msra.mxu0 0.0
    %454 = vmatprep.subr.mxu0 0.0
    %455 = vmatpush1.msra.mxu0 0.0
    %456 = vmatprep.subr.mxu0 0.0
    %457 = vmatpush1.msra.mxu0 0.0
    %458 = vmatprep.subr.mxu0 0.0
    %459 = vmatpush1.msra.mxu0 0.0
    %460 = vmatprep.subr.mxu0 0.0
    %461 = vmatpush1.msra.mxu0 0.0
    %462 = vmatprep.subr.mxu0 0.0
    %463 = vmatpush1.msra.mxu0 0.0
    %464 = vmatprep.subr.mxu0 0.0
    %465 = vmatpush1.msra.mxu0 0.0
    %466 = vmatprep.subr.mxu0 0.0
    %467 = vmatpush1.msra.mxu0 0.0
    %468 = vmatprep.subr.mxu0 0.0
    %469 = vmatpush1.msra.mxu0 0.0
    %470 = vmatprep.mubr.f32.mxu0 0.0
    %471 = vmatmul.mubr.f32.gmra.mrb[0].mxu0 %v404
    %v472 = vpop.f32.mrb[0].mxu0
    %v473 = vadd.f32 0.0, %v472
    %v474 = vpop.f32.mrb[0].mxu0
    %475 = vdwg.mxu0
    %v476 = vadd.f32 %v403, %v473
    %v477 = vxor.u32 %v476, 2147483648
    %v478 = vmul.f32 %v477, 1.442695
    %v479 = vpow.pop %v478
    %v480 = vadd.f32 %v479, 1.0
    %v481 = vrcp.pop %v480
    %v482 = vmul.f32 1.0, %v481
    %v483 = vtanh.pop %v476
    %v484 = vmul.f32 %v482, %v391
    %486 = vrot.lane.b32.xlu0 %v483, 64
    %v487 = vpop.permute.xlu0 %486
    %v489 = vmul.f32 %v482, %v487
    %491 = vrot.lane.b32.xlu0 %v489, 32
    %v492 = vpop.permute.xlu0 %491
    %v494 = vadd.f32 %v484, %v492
    %v495 = vtanh.pop %v494
    %497 = vrot.lane.b32.xlu0 %v495, 64
    %v498 = vpop.permute.xlu0 %497
    %v500 = vmul.f32 %v482, %v498
    %502 = vrot.lane.b32.xlu0 %v500, 32
    %v503 = vpop.permute.xlu0 %502
    %505 = vst.msk [vmem:[#allocation3 + $0x10] sm:$0xff] %vm196, %v503
    %v506 = vld [vmem:[#allocation2 + $0x18] sm:$0xff]
    %v507 = vsel %vm196, %v503, 0
    %509 = vmatprep.subr.mxu0 0.0
    %510 = vmatpush1.msra.mxu0 %v191
    %511 = vmatprep.subr.mxu0 0.0
    %512 = vmatpush1.msra.mxu0 %v192
    %513 = vmatprep.subr.mxu0 0.0
    %514 = vmatpush1.msra.mxu0 %v193
    %515 = vmatprep.subr.mxu0 0.0
    %516 = vmatpush1.msra.mxu0 %v194
    %517 = vmatprep.subr.mxu0 0.0
    %518 = vmatpush1.msra.mxu0 0.0
    %519 = vmatprep.subr.mxu0 0.0
    %520 = vmatpush1.msra.mxu0 0.0
    %521 = vmatprep.subr.mxu0 0.0
    %522 = vmatpush1.msra.mxu0 0.0
    %523 = vmatprep.subr.mxu0 0.0
    %524 = vmatpush1.msra.mxu0 0.0
    %525 = vmatprep.subr.mxu0 0.0
    %526 = vmatpush1.msra.mxu0 0.0
    %527 = vmatprep.subr.mxu0 0.0
    %528 = vmatpush1.msra.mxu0 0.0
    %529 = vmatprep.subr.mxu0 0.0
    %530 = vmatpush1.msra.mxu0 0.0
    %531 = vmatprep.subr.mxu0 0.0
    %532 = vmatpush1.msra.mxu0 0.0
    %533 = vmatprep.subr.mxu0 0.0
    %534 = vmatpush1.msra.mxu0 0.0
    %535 = vmatprep.subr.mxu0 0.0
    %536 = vmatpush1.msra.mxu0 0.0
    %537 = vmatprep.subr.mxu0 0.0
    %538 = vmatpush1.msra.mxu0 0.0
    %539 = vmatprep.subr.mxu0 0.0
    %540 = vmatpush1.msra.mxu0 0.0
    %541 = vmatprep.subr.mxu0 0.0
    %542 = vmatpush1.msra.mxu0 0.0
    %543 = vmatprep.subr.mxu0 0.0
    %544 = vmatpush1.msra.mxu0 0.0
    %545 = vmatprep.subr.mxu0 0.0
    %546 = vmatpush1.msra.mxu0 0.0
    %547 = vmatprep.subr.mxu0 0.0
    %548 = vmatpush1.msra.mxu0 0.0
    %549 = vmatprep.subr.mxu0 0.0
    %550 = vmatpush1.msra.mxu0 0.0
    %551 = vmatprep.subr.mxu0 0.0
    %552 = vmatpush1.msra.mxu0 0.0
    %553 = vmatprep.subr.mxu0 0.0
    %554 = vmatpush1.msra.mxu0 0.0
    %555 = vmatprep.subr.mxu0 0.0
    %556 = vmatpush1.msra.mxu0 0.0
    %557 = vmatprep.subr.mxu0 0.0
    %558 = vmatpush1.msra.mxu0 0.0
    %559 = vmatprep.subr.mxu0 0.0
    %560 = vmatpush1.msra.mxu0 0.0
    %561 = vmatprep.subr.mxu0 0.0
    %562 = vmatpush1.msra.mxu0 0.0
    %563 = vmatprep.subr.mxu0 0.0
    %564 = vmatpush1.msra.mxu0 0.0
    %565 = vmatprep.subr.mxu0 0.0
    %566 = vmatpush1.msra.mxu0 0.0
    %567 = vmatprep.subr.mxu0 0.0
    %568 = vmatpush1.msra.mxu0 0.0
    %569 = vmatprep.subr.mxu0 0.0
    %570 = vmatpush1.msra.mxu0 0.0
    %571 = vmatprep.subr.mxu0 0.0
    %572 = vmatpush1.msra.mxu0 0.0
    %573 = vmatprep.mubr.f32.mxu0 0.0
    %574 = vmatmul.mubr.f32.gmra.mrb[0].mxu0 %v507
    %v575 = vpop.f32.mrb[0].mxu0
    %v576 = vadd.f32 0.0, %v575
    %v577 = vpop.f32.mrb[0].mxu0
    %578 = vdwg.mxu0
    %v579 = vadd.f32 %v506, %v576
    %v580 = vxor.u32 %v579, 2147483648
    %v581 = vmul.f32 %v580, 1.442695
    %v582 = vpow.pop %v581
    %v583 = vadd.f32 %v582, 1.0
    %v584 = vrcp.pop %v583
    %v585 = vmul.f32 1.0, %v584
    %v586 = vtanh.pop %v579
    %v587 = vmul.f32 %v585, %v494
    %589 = vrot.lane.b32.xlu0 %v586, 64
    %v590 = vpop.permute.xlu0 %589
    %v592 = vmul.f32 %v585, %v590
    %594 = vrot.lane.b32.xlu0 %v592, 32
    %v595 = vpop.permute.xlu0 %594
    %v597 = vadd.f32 %v587, %v595
    %v598 = vtanh.pop %v597
    %600 = vrot.lane.b32.xlu0 %v598, 64
    %v601 = vpop.permute.xlu0 %600
    %v603 = vmul.f32 %v585, %v601
    %605 = vrot.lane.b32.xlu0 %v603, 32
    %v606 = vpop.permute.xlu0 %605
    %608 = vst.msk [vmem:[#allocation3 + $0x18] sm:$0xff] %vm196, %v606
    %v609 = vld [vmem:[#allocation2 + $0x20] sm:$0xff]
    %v610 = vsel %vm196, %v606, 0
    %612 = vmatprep.subr.mxu0 0.0
    %613 = vmatpush1.msra.mxu0 %v191
    %614 = vmatprep.subr.mxu0 0.0
    %615 = vmatpush1.msra.mxu0 %v192
    %616 = vmatprep.subr.mxu0 0.0
    %617 = vmatpush1.msra.mxu0 %v193
    %618 = vmatprep.subr.mxu0 0.0
    %619 = vmatpush1.msra.mxu0 %v194
    %620 = vmatprep.subr.mxu0 0.0
    %621 = vmatpush1.msra.mxu0 0.0
    %622 = vmatprep.subr.mxu0 0.0
    %623 = vmatpush1.msra.mxu0 0.0
    %624 = vmatprep.subr.mxu0 0.0
    %625 = vmatpush1.msra.mxu0 0.0
    %626 = vmatprep.subr.mxu0 0.0
    %627 = vmatpush1.msra.mxu0 0.0
    %628 = vmatprep.subr.mxu0 0.0
    %629 = vmatpush1.msra.mxu0 0.0
    %630 = vmatprep.subr.mxu0 0.0
    %631 = vmatpush1.msra.mxu0 0.0
    %632 = vmatprep.subr.mxu0 0.0
    %633 = vmatpush1.msra.mxu0 0.0
    %634 = vmatprep.subr.mxu0 0.0
    %635 = vmatpush1.msra.mxu0 0.0
    %636 = vmatprep.subr.mxu0 0.0
    %637 = vmatpush1.msra.mxu0 0.0
    %638 = vmatprep.subr.mxu0 0.0
    %639 = vmatpush1.msra.mxu0 0.0
    %640 = vmatprep.subr.mxu0 0.0
    %641 = vmatpush1.msra.mxu0 0.0
    %642 = vmatprep.subr.mxu0 0.0
    %643 = vmatpush1.msra.mxu0 0.0
    %644 = vmatprep.subr.mxu0 0.0
    %645 = vmatpush1.msra.mxu0 0.0
    %646 = vmatprep.subr.mxu0 0.0
    %647 = vmatpush1.msra.mxu0 0.0
    %648 = vmatprep.subr.mxu0 0.0
    %649 = vmatpush1.msra.mxu0 0.0
    %650 = vmatprep.subr.mxu0 0.0
    %651 = vmatpush1.msra.mxu0 0.0
    %652 = vmatprep.subr.mxu0 0.0
    %653 = vmatpush1.msra.mxu0 0.0
    %654 = vmatprep.subr.mxu0 0.0
    %655 = vmatpush1.msra.mxu0 0.0
    %656 = vmatprep.subr.mxu0 0.0
    %657 = vmatpush1.msra.mxu0 0.0
    %658 = vmatprep.subr.mxu0 0.0
    %659 = vmatpush1.msra.mxu0 0.0
    %660 = vmatprep.subr.mxu0 0.0
    %661 = vmatpush1.msra.mxu0 0.0
    %662 = vmatprep.subr.mxu0 0.0
    %663 = vmatpush1.msra.mxu0 0.0
    %664 = vmatprep.subr.mxu0 0.0
    %665 = vmatpush1.msra.mxu0 0.0
    %666 = vmatprep.subr.mxu0 0.0
    %667 = vmatpush1.msra.mxu0 0.0
    %668 = vmatprep.subr.mxu0 0.0
    %669 = vmatpush1.msra.mxu0 0.0
    %670 = vmatprep.subr.mxu0 0.0
    %671 = vmatpush1.msra.mxu0 0.0
    %672 = vmatprep.subr.mxu0 0.0
    %673 = vmatpush1.msra.mxu0 0.0
    %674 = vmatprep.subr.mxu0 0.0
    %675 = vmatpush1.msra.mxu0 0.0
    %676 = vmatprep.mubr.f32.mxu0 0.0
    %677 = vmatmul.mubr.f32.gmra.mrb[0].mxu0 %v610
    %v678 = vpop.f32.mrb[0].mxu0
    %v679 = vadd.f32 0.0, %v678
    %v680 = vpop.f32.mrb[0].mxu0
    %681 = vdwg.mxu0
    %v682 = vadd.f32 %v609, %v679
    %v683 = vxor.u32 %v682, 2147483648
    %v684 = vmul.f32 %v683, 1.442695
    %v685 = vpow.pop %v684
    %v686 = vadd.f32 %v685, 1.0
    %v687 = vrcp.pop %v686
    %v688 = vmul.f32 1.0, %v687
    %v689 = vtanh.pop %v682
    %v690 = vmul.f32 %v688, %v597
    %692 = vrot.lane.b32.xlu0 %v689, 64
    %v693 = vpop.permute.xlu0 %692
    %v695 = vmul.f32 %v688, %v693
    %697 = vrot.lane.b32.xlu0 %v695, 32
    %v698 = vpop.permute.xlu0 %697
    %v700 = vadd.f32 %v690, %v698
    %v701 = vtanh.pop %v700
    %703 = vrot.lane.b32.xlu0 %v701, 64
    %v704 = vpop.permute.xlu0 %703
    %v706 = vmul.f32 %v688, %v704
    %708 = vrot.lane.b32.xlu0 %v706, 32
    %v709 = vpop.permute.xlu0 %708
    %711 = vst.msk [vmem:[#allocation3 + $0x20] sm:$0xff] %vm196, %v709
    %v712 = vld [vmem:[#allocation2 + $0x28] sm:$0xff]
    %v713 = vsel %vm196, %v709, 0
    %715 = vmatprep.subr.mxu0 0.0
    %716 = vmatpush1.msra.mxu0 %v191
    %717 = vmatprep.subr.mxu0 0.0
    %718 = vmatpush1.msra.mxu0 %v192
    %719 = vmatprep.subr.mxu0 0.0
    %720 = vmatpush1.msra.mxu0 %v193
    %721 = vmatprep.subr.mxu0 0.0
    %722 = vmatpush1.msra.mxu0 %v194
    %723 = vmatprep.subr.mxu0 0.0
    %724 = vmatpush1.msra.mxu0 0.0
    %725 = vmatprep.subr.mxu0 0.0
    %726 = vmatpush1.msra.mxu0 0.0
    %727 = vmatprep.subr.mxu0 0.0
    %728 = vmatpush1.msra.mxu0 0.0
    %729 = vmatprep.subr.mxu0 0.0
    %730 = vmatpush1.msra.mxu0 0.0
    %731 = vmatprep.subr.mxu0 0.0
    %732 = vmatpush1.msra.mxu0 0.0
    %733 = vmatprep.subr.mxu0 0.0
    %734 = vmatpush1.msra.mxu0 0.0
    %735 = vmatprep.subr.mxu0 0.0
    %736 = vmatpush1.msra.mxu0 0.0
    %737 = vmatprep.subr.mxu0 0.0
    %738 = vmatpush1.msra.mxu0 0.0
    %739 = vmatprep.subr.mxu0 0.0
    %740 = vmatpush1.msra.mxu0 0.0
    %741 = vmatprep.subr.mxu0 0.0
    %742 = vmatpush1.msra.mxu0 0.0
    %743 = vmatprep.subr.mxu0 0.0
    %744 = vmatpush1.msra.mxu0 0.0
    %745 = vmatprep.subr.mxu0 0.0
    %746 = vmatpush1.msra.mxu0 0.0
    %747 = vmatprep.subr.mxu0 0.0
    %748 = vmatpush1.msra.mxu0 0.0
    %749 = vmatprep.subr.mxu0 0.0
    %750 = vmatpush1.msra.mxu0 0.0
    %751 = vmatprep.subr.mxu0 0.0
    %752 = vmatpush1.msra.mxu0 0.0
    %753 = vmatprep.subr.mxu0 0.0
    %754 = vmatpush1.msra.mxu0 0.0
    %755 = vmatprep.subr.mxu0 0.0
    %756 = vmatpush1.msra.mxu0 0.0
    %757 = vmatprep.subr.mxu0 0.0
    %758 = vmatpush1.msra.mxu0 0.0
    %759 = vmatprep.subr.mxu0 0.0
    %760 = vmatpush1.msra.mxu0 0.0
    %761 = vmatprep.subr.mxu0 0.0
    %762 = vmatpush1.msra.mxu0 0.0
    %763 = vmatprep.subr.mxu0 0.0
    %764 = vmatpush1.msra.mxu0 0.0
    %765 = vmatprep.subr.mxu0 0.0
    %766 = vmatpush1.msra.mxu0 0.0
    %767 = vmatprep.subr.mxu0 0.0
    %768 = vmatpush1.msra.mxu0 0.0
    %769 = vmatprep.subr.mxu0 0.0
    %770 = vmatpush1.msra.mxu0 0.0
    %771 = vmatprep.subr.mxu0 0.0
    %772 = vmatpush1.msra.mxu0 0.0
    %773 = vmatprep.subr.mxu0 0.0
    %774 = vmatpush1.msra.mxu0 0.0
    %775 = vmatprep.subr.mxu0 0.0
    %776 = vmatpush1.msra.mxu0 0.0
    %777 = vmatprep.subr.mxu0 0.0
    %778 = vmatpush1.msra.mxu0 0.0
    %779 = vmatprep.mubr.f32.mxu0 0.0
    %780 = vmatmul.mubr.f32.gmra.mrb[0].mxu0 %v713
    %v781 = vpop.f32.mrb[0].mxu0
    %v782 = vadd.f32 0.0, %v781
    %v783 = vpop.f32.mrb[0].mxu0
    %784 = vdwg.mxu0
    %v785 = vadd.f32 %v712, %v782
    %v786 = vxor.u32 %v785, 2147483648
    %v787 = vmul.f32 %v786, 1.442695
    %v788 = vpow.pop %v787
    %v789 = vadd.f32 %v788, 1.0
    %v790 = vrcp.pop %v789
    %v791 = vmul.f32 1.0, %v790
    %v792 = vtanh.pop %v785
    %v793 = vmul.f32 %v791, %v700
    %795 = vrot.lane.b32.xlu0 %v792, 64
    %v796 = vpop.permute.xlu0 %795
    %v798 = vmul.f32 %v791, %v796
    %800 = vrot.lane.b32.xlu0 %v798, 32
    %v801 = vpop.permute.xlu0 %800
    %v803 = vadd.f32 %v793, %v801
    %v804 = vtanh.pop %v803
    %806 = vrot.lane.b32.xlu0 %v804, 64
    %v807 = vpop.permute.xlu0 %806
    %v809 = vmul.f32 %v791, %v807
    %811 = vrot.lane.b32.xlu0 %v809, 32
    %v812 = vpop.permute.xlu0 %811
    %814 = vst.msk [vmem:[#allocation3 + $0x28] sm:$0xff] %vm196, %v812
    %v815 = vld [vmem:[#allocation2 + $0x30] sm:$0xff]
    %v816 = vsel %vm196, %v812, 0
    %818 = vmatprep.subr.mxu0 0.0
    %819 = vmatpush1.msra.mxu0 %v191
    %820 = vmatprep.subr.mxu0 0.0
    %821 = vmatpush1.msra.mxu0 %v192
    %822 = vmatprep.subr.mxu0 0.0
    %823 = vmatpush1.msra.mxu0 %v193
    %824 = vmatprep.subr.mxu0 0.0
    %825 = vmatpush1.msra.mxu0 %v194
    %826 = vmatprep.subr.mxu0 0.0
    %827 = vmatpush1.msra.mxu0 0.0
    %828 = vmatprep.subr.mxu0 0.0
    %829 = vmatpush1.msra.mxu0 0.0
    %830 = vmatprep.subr.mxu0 0.0
    %831 = vmatpush1.msra.mxu0 0.0
    %832 = vmatprep.subr.mxu0 0.0
    %833 = vmatpush1.msra.mxu0 0.0
    %834 = vmatprep.subr.mxu0 0.0
    %835 = vmatpush1.msra.mxu0 0.0
    %836 = vmatprep.subr.mxu0 0.0
    %837 = vmatpush1.msra.mxu0 0.0
    %838 = vmatprep.subr.mxu0 0.0
    %839 = vmatpush1.msra.mxu0 0.0
    %840 = vmatprep.subr.mxu0 0.0
    %841 = vmatpush1.msra.mxu0 0.0
    %842 = vmatprep.subr.mxu0 0.0
    %843 = vmatpush1.msra.mxu0 0.0
    %844 = vmatprep.subr.mxu0 0.0
    %845 = vmatpush1.msra.mxu0 0.0
    %846 = vmatprep.subr.mxu0 0.0
    %847 = vmatpush1.msra.mxu0 0.0
    %848 = vmatprep.subr.mxu0 0.0
    %849 = vmatpush1.msra.mxu0 0.0
    %850 = vmatprep.subr.mxu0 0.0
    %851 = vmatpush1.msra.mxu0 0.0
    %852 = vmatprep.subr.mxu0 0.0
    %853 = vmatpush1.msra.mxu0 0.0
    %854 = vmatprep.subr.mxu0 0.0
    %855 = vmatpush1.msra.mxu0 0.0
    %856 = vmatprep.subr.mxu0 0.0
    %857 = vmatpush1.msra.mxu0 0.0
    %858 = vmatprep.subr.mxu0 0.0
    %859 = vmatpush1.msra.mxu0 0.0
    %860 = vmatprep.subr.mxu0 0.0
    %861 = vmatpush1.msra.mxu0 0.0
    %862 = vmatprep.subr.mxu0 0.0
    %863 = vmatpush1.msra.mxu0 0.0
    %864 = vmatprep.subr.mxu0 0.0
    %865 = vmatpush1.msra.mxu0 0.0
    %866 = vmatprep.subr.mxu0 0.0
    %867 = vmatpush1.msra.mxu0 0.0
    %868 = vmatprep.subr.mxu0 0.0
    %869 = vmatpush1.msra.mxu0 0.0
    %870 = vmatprep.subr.mxu0 0.0
    %871 = vmatpush1.msra.mxu0 0.0
    %872 = vmatprep.subr.mxu0 0.0
    %873 = vmatpush1.msra.mxu0 0.0
    %874 = vmatprep.subr.mxu0 0.0
    %875 = vmatpush1.msra.mxu0 0.0
    %876 = vmatprep.subr.mxu0 0.0
    %877 = vmatpush1.msra.mxu0 0.0
    %878 = vmatprep.subr.mxu0 0.0
    %879 = vmatpush1.msra.mxu0 0.0
    %880 = vmatprep.subr.mxu0 0.0
    %881 = vmatpush1.msra.mxu0 0.0
    %882 = vmatprep.mubr.f32.mxu0 0.0
    %883 = vmatmul.mubr.f32.gmra.mrb[0].mxu0 %v816
    %v884 = vpop.f32.mrb[0].mxu0
    %v885 = vadd.f32 0.0, %v884
    %v886 = vpop.f32.mrb[0].mxu0
    %887 = vdwg.mxu0
    %v888 = vadd.f32 %v815, %v885
    %v889 = vxor.u32 %v888, 2147483648
    %v890 = vmul.f32 %v889, 1.442695
    %v891 = vpow.pop %v890
    %v892 = vadd.f32 %v891, 1.0
    %v893 = vrcp.pop %v892
    %v894 = vmul.f32 1.0, %v893
    %v895 = vtanh.pop %v888
    %v896 = vmul.f32 %v894, %v803
    %898 = vrot.lane.b32.xlu0 %v895, 64
    %v899 = vpop.permute.xlu0 %898
    %v901 = vmul.f32 %v894, %v899
    %903 = vrot.lane.b32.xlu0 %v901, 32
    %v904 = vpop.permute.xlu0 %903
    %v906 = vadd.f32 %v896, %v904
    %v907 = vtanh.pop %v906
    %909 = vrot.lane.b32.xlu0 %v907, 64
    %v910 = vpop.permute.xlu0 %909
    %v912 = vmul.f32 %v894, %v910
    %914 = vrot.lane.b32.xlu0 %v912, 32
    %v915 = vpop.permute.xlu0 %914
    %917 = vst.msk [vmem:[#allocation3 + $0x30] sm:$0xff] %vm196, %v915
    %v918 = vld [vmem:[#allocation2 + $0x38] sm:$0xff]
    %v919 = vsel %vm196, %v915, 0
    %921 = vmatprep.subr.mxu0 0.0
    %922 = vmatpush1.msra.mxu0 %v191
    %923 = vmatprep.subr.mxu0 0.0
    %924 = vmatpush1.msra.mxu0 %v192
    %925 = vmatprep.subr.mxu0 0.0
    %926 = vmatpush1.msra.mxu0 %v193
    %927 = vmatprep.subr.mxu0 0.0
    %928 = vmatpush1.msra.mxu0 %v194
    %929 = vmatprep.subr.mxu0 0.0
    %930 = vmatpush1.msra.mxu0 0.0
    %931 = vmatprep.subr.mxu0 0.0
    %932 = vmatpush1.msra.mxu0 0.0
    %933 = vmatprep.subr.mxu0 0.0
    %934 = vmatpush1.msra.mxu0 0.0
    %935 = vmatprep.subr.mxu0 0.0
    %936 = vmatpush1.msra.mxu0 0.0
    %937 = vmatprep.subr.mxu0 0.0
    %938 = vmatpush1.msra.mxu0 0.0
    %939 = vmatprep.subr.mxu0 0.0
    %940 = vmatpush1.msra.mxu0 0.0
    %941 = vmatprep.subr.mxu0 0.0
    %942 = vmatpush1.msra.mxu0 0.0
    %943 = vmatprep.subr.mxu0 0.0
    %944 = vmatpush1.msra.mxu0 0.0
    %945 = vmatprep.subr.mxu0 0.0
    %946 = vmatpush1.msra.mxu0 0.0
    %947 = vmatprep.subr.mxu0 0.0
    %948 = vmatpush1.msra.mxu0 0.0
    %949 = vmatprep.subr.mxu0 0.0
    %950 = vmatpush1.msra.mxu0 0.0
    %951 = vmatprep.subr.mxu0 0.0
    %952 = vmatpush1.msra.mxu0 0.0
    %953 = vmatprep.subr.mxu0 0.0
    %954 = vmatpush1.msra.mxu0 0.0
    %955 = vmatprep.subr.mxu0 0.0
    %956 = vmatpush1.msra.mxu0 0.0
    %957 = vmatprep.subr.mxu0 0.0
    %958 = vmatpush1.msra.mxu0 0.0
    %959 = vmatprep.subr.mxu0 0.0
    %960 = vmatpush1.msra.mxu0 0.0
    %961 = vmatprep.subr.mxu0 0.0
    %962 = vmatpush1.msra.mxu0 0.0
    %963 = vmatprep.subr.mxu0 0.0
    %964 = vmatpush1.msra.mxu0 0.0
    %965 = vmatprep.subr.mxu0 0.0
    %966 = vmatpush1.msra.mxu0 0.0
    %967 = vmatprep.subr.mxu0 0.0
    %968 = vmatpush1.msra.mxu0 0.0
    %969 = vmatprep.subr.mxu0 0.0
    %970 = vmatpush1.msra.mxu0 0.0
    %971 = vmatprep.subr.mxu0 0.0
    %972 = vmatpush1.msra.mxu0 0.0
    %973 = vmatprep.subr.mxu0 0.0
    %974 = vmatpush1.msra.mxu0 0.0
    %975 = vmatprep.subr.mxu0 0.0
    %976 = vmatpush1.msra.mxu0 0.0
    %977 = vmatprep.subr.mxu0 0.0
    %978 = vmatpush1.msra.mxu0 0.0
    %979 = vmatprep.subr.mxu0 0.0
    %980 = vmatpush1.msra.mxu0 0.0
    %981 = vmatprep.subr.mxu0 0.0
    %982 = vmatpush1.msra.mxu0 0.0
    %983 = vmatprep.subr.mxu0 0.0
    %984 = vmatpush1.msra.mxu0 0.0
    %985 = vmatprep.mubr.f32.mxu0 0.0
    %986 = vmatmul.mubr.f32.gmra.mrb[0].mxu0 %v919
    %v987 = vpop.f32.mrb[0].mxu0
    %v988 = vadd.f32 0.0, %v987
    %v989 = vpop.f32.mrb[0].mxu0
    %990 = vdwg.mxu0
    %v991 = vadd.f32 %v918, %v988
    %v992 = vxor.u32 %v991, 2147483648
    %v993 = vmul.f32 %v992, 1.442695
    %v994 = vpow.pop %v993
    %v995 = vadd.f32 %v994, 1.0
    %v996 = vrcp.pop %v995
    %v997 = vmul.f32 1.0, %v996
    %v998 = vtanh.pop %v991
    %v999 = vmul.f32 %v997, %v906
    %1001 = vrot.lane.b32.xlu0 %v998, 64
    %v1002 = vpop.permute.xlu0 %1001
    %v1004 = vmul.f32 %v997, %v1002
    %1006 = vrot.lane.b32.xlu0 %v1004, 32
    %v1007 = vpop.permute.xlu0 %1006
    %v1009 = vadd.f32 %v999, %v1007
    %v1010 = vtanh.pop %v1009
    %1012 = vrot.lane.b32.xlu0 %v1010, 64
    %v1013 = vpop.permute.xlu0 %1012
    %v1015 = vmul.f32 %v997, %v1013
    %1017 = vrot.lane.b32.xlu0 %v1015, 32
    %v1018 = vpop.permute.xlu0 %1017
    %1020 = vst.msk [vmem:[#allocation3 + $0x38] sm:$0xff] %vm196, %v1018
    %1021 = vst.msk [vmem:[#allocation6] sm:$0xff] %vm196, %v1018
    %v1022 = vld [vmem:[#allocation3] sm:$0xff]
    %v1023 = vld [vmem:[#allocation3 + $0x8] sm:$0xff]
    %v1024 = vld [vmem:[#allocation3 + $0x10] sm:$0xff]
    %v1025 = vld [vmem:[#allocation3 + $0x18] sm:$0xff]
    %v1026 = vld [vmem:[#allocation3 + $0x20] sm:$0xff]
    %v1027 = vld [vmem:[#allocation3 + $0x28] sm:$0xff]
    %v1028 = vld [vmem:[#allocation3 + $0x30] sm:$0xff]
    %v1029 = vld [vmem:[#allocation3 + $0x38] sm:$0xff]
    %v1030 = vld [vmem:[%s4] sm:$0xff]
    %v1031 = vld [vmem:[%s4 + $0x8] sm:$0xff]
    %v1032 = vld [vmem:[%s4 + $0x10] sm:$0xff]
    %v1033 = vld [vmem:[%s4 + $0x18] sm:$0xff]
    %v1034 = vld [vmem:[%s6] sm:$0x1]
    %v1036 = vlaneseq
    %v1037 = vshrl.u32 %v1036, 7
    %v1038 = vsub.s32 0, %v1037
    %v1039 = vrot.slane %v1034, %v1038
    %v1042 = vsel %vm196, %v1022, 0
    %v1045 = vsel %vm196, %v1023, 0
    %v1048 = vsel %vm196, %v1024, 0
    %v1051 = vsel %vm196, %v1025, 0
    %v1054 = vsel %vm196, %v1026, 0
    %v1057 = vsel %vm196, %v1027, 0
    %v1060 = vsel %vm196, %v1028, 0
    %v1063 = vsel %vm196, %v1029, 0
    %1065 = vmatprep.subr.mxu0 0.0
    %1066 = vmatpush1.msra.mxu0 %v1030
    %1067 = vmatprep.subr.mxu0 0.0
    %1068 = vmatpush1.msra.mxu0 %v1031
    %1069 = vmatprep.subr.mxu0 0.0
    %1070 = vmatpush1.msra.mxu0 %v1032
    %1071 = vmatprep.subr.mxu0 0.0
    %1072 = vmatpush1.msra.mxu0 %v1033
    %1073 = vmatprep.subr.mxu0 0.0
    %1074 = vmatpush1.msra.mxu0 0.0
    %1075 = vmatprep.subr.mxu0 0.0
    %1076 = vmatpush1.msra.mxu0 0.0
    %1077 = vmatprep.subr.mxu0 0.0
    %1078 = vmatpush1.msra.mxu0 0.0
    %1079 = vmatprep.subr.mxu0 0.0
    %1080 = vmatpush1.msra.mxu0 0.0
    %1081 = vmatprep.subr.mxu0 0.0
    %1082 = vmatpush1.msra.mxu0 0.0
    %1083 = vmatprep.subr.mxu0 0.0
    %1084 = vmatpush1.msra.mxu0 0.0
    %1085 = vmatprep.subr.mxu0 0.0
    %1086 = vmatpush1.msra.mxu0 0.0
    %1087 = vmatprep.subr.mxu0 0.0
    %1088 = vmatpush1.msra.mxu0 0.0
    %1089 = vmatprep.subr.mxu0 0.0
    %1090 = vmatpush1.msra.mxu0 0.0
    %1091 = vmatprep.subr.mxu0 0.0
    %1092 = vmatpush1.msra.mxu0 0.0
    %1093 = vmatprep.subr.mxu0 0.0
    %1094 = vmatpush1.msra.mxu0 0.0
    %1095 = vmatprep.subr.mxu0 0.0
    %1096 = vmatpush1.msra.mxu0 0.0
    %1097 = vmatprep.subr.mxu0 0.0
    %1098 = vmatpush1.msra.mxu0 0.0
    %1099 = vmatprep.subr.mxu0 0.0
    %1100 = vmatpush1.msra.mxu0 0.0
    %1101 = vmatprep.subr.mxu0 0.0
    %1102 = vmatpush1.msra.mxu0 0.0
    %1103 = vmatprep.subr.mxu0 0.0
    %1104 = vmatpush1.msra.mxu0 0.0
    %1105 = vmatprep.subr.mxu0 0.0
    %1106 = vmatpush1.msra.mxu0 0.0
    %1107 = vmatprep.subr.mxu0 0.0
    %1108 = vmatpush1.msra.mxu0 0.0
    %1109 = vmatprep.subr.mxu0 0.0
    %1110 = vmatpush1.msra.mxu0 0.0
    %1111 = vmatprep.subr.mxu0 0.0
    %1112 = vmatpush1.msra.mxu0 0.0
    %1113 = vmatprep.subr.mxu0 0.0
    %1114 = vmatpush1.msra.mxu0 0.0
    %1115 = vmatprep.subr.mxu0 0.0
    %1116 = vmatpush1.msra.mxu0 0.0
    %1117 = vmatprep.subr.mxu0 0.0
    %1118 = vmatpush1.msra.mxu0 0.0
    %1119 = vmatprep.subr.mxu0 0.0
    %1120 = vmatpush1.msra.mxu0 0.0
    %1121 = vmatprep.subr.mxu0 0.0
    %1122 = vmatpush1.msra.mxu0 0.0
    %1123 = vmatprep.subr.mxu0 0.0
    %1124 = vmatpush1.msra.mxu0 0.0
    %1125 = vmatprep.subr.mxu0 0.0
    %1126 = vmatpush1.msra.mxu0 0.0
    %1127 = vmatprep.subr.mxu0 0.0
    %1128 = vmatpush1.msra.mxu0 0.0
    %1129 = vmatprep.mubr.f32.mxu0 0.0
    %1130 = vmatmul.mubr.f32.gmra.mrb[0].mxu0 %v1042
    %v1131 = vpop.f32.mrb[0].mxu0
    %v1132 = vadd.f32 %v1039, %v1131
    %v1133 = vpop.f32.mrb[0].mxu0
    %1134 = vmatprep.mubr.f32.mxu0 0.0
    %1135 = vmatmul.mubr.f32.gmra.mrb[0].mxu0 %v1045
    %v1136 = vpop.f32.mrb[0].mxu0
    %v1137 = vadd.f32 %v1039, %v1136
    %v1138 = vpop.f32.mrb[0].mxu0
    %1139 = vmatprep.mubr.f32.mxu0 0.0
    %1140 = vmatmul.mubr.f32.gmra.mrb[0].mxu0 %v1048
    %v1141 = vpop.f32.mrb[0].mxu0
    %v1142 = vadd.f32 %v1039, %v1141
    %v1143 = vpop.f32.mrb[0].mxu0
    %1144 = vmatprep.mubr.f32.mxu0 0.0
    %1145 = vmatmul.mubr.f32.gmra.mrb[0].mxu0 %v1051
    %v1146 = vpop.f32.mrb[0].mxu0
    %v1147 = vadd.f32 %v1039, %v1146
    %v1148 = vpop.f32.mrb[0].mxu0
    %1149 = vmatprep.mubr.f32.mxu0 0.0
    %1150 = vmatmul.mubr.f32.gmra.mrb[0].mxu0 %v1054
    %v1151 = vpop.f32.mrb[0].mxu0
    %v1152 = vadd.f32 %v1039, %v1151
    %v1153 = vpop.f32.mrb[0].mxu0
    %1154 = vmatprep.mubr.f32.mxu0 0.0
    %1155 = vmatmul.mubr.f32.gmra.mrb[0].mxu0 %v1057
    %v1156 = vpop.f32.mrb[0].mxu0
    %v1157 = vadd.f32 %v1039, %v1156
    %v1158 = vpop.f32.mrb[0].mxu0
    %1159 = vmatprep.mubr.f32.mxu0 0.0
    %1160 = vmatmul.mubr.f32.gmra.mrb[0].mxu0 %v1060
    %v1161 = vpop.f32.mrb[0].mxu0
    %v1162 = vadd.f32 %v1039, %v1161
    %v1163 = vpop.f32.mrb[0].mxu0
    %1164 = vmatprep.mubr.f32.mxu0 0.0
    %1165 = vmatmul.mubr.f32.gmra.mrb[0].mxu0 %v1063
    %v1166 = vpop.f32.mrb[0].mxu0
    %v1167 = vadd.f32 %v1039, %v1166
    %v1168 = vpop.f32.mrb[0].mxu0
    %1169 = vdwg.mxu0
    %1170 = vst [vmem:[#allocation2] sm:$0xff] %v1132
    %1171 = vst [vmem:[#allocation2 + $0x8] sm:$0xff] %v1137
    %1172 = vst [vmem:[#allocation2 + $0x10] sm:$0xff] %v1142
    %1173 = vst [vmem:[#allocation2 + $0x18] sm:$0xff] %v1147
    %1174 = vst [vmem:[#allocation2 + $0x20] sm:$0xff] %v1152
    %1175 = vst [vmem:[#allocation2 + $0x28] sm:$0xff] %v1157
    %1176 = vst [vmem:[#allocation2 + $0x30] sm:$0xff] %v1162
    %1177 = vst [vmem:[#allocation2 + $0x38] sm:$0xff] %v1167
    %v1178 = vld [vmem:[%s5] sm:$0xff]
    %v1179 = vld [vmem:[%s5 + $0x8] sm:$0xff]
    %v1180 = vld [vmem:[%s5 + $0x10] sm:$0xff]
    %v1181 = vld [vmem:[%s5 + $0x18] sm:$0xff]
    %v1182 = vld [vmem:[#allocation2] sm:$0xff]
    %1183 = vmatprep.subr.mxu0 0.0
    %1184 = vmatpush1.msra.mxu0 %v1178
    %1185 = vmatprep.subr.mxu0 0.0
    %1186 = vmatpush1.msra.mxu0 %v1179
    %1187 = vmatprep.subr.mxu0 0.0
    %1188 = vmatpush1.msra.mxu0 %v1180
    %1189 = vmatprep.subr.mxu0 0.0
    %1190 = vmatpush1.msra.mxu0 %v1181
    %1191 = vmatprep.subr.mxu0 0.0
    %1192 = vmatpush1.msra.mxu0 0.0
    %1193 = vmatprep.subr.mxu0 0.0
    %1194 = vmatpush1.msra.mxu0 0.0
    %1195 = vmatprep.subr.mxu0 0.0
    %1196 = vmatpush1.msra.mxu0 0.0
    %1197 = vmatprep.subr.mxu0 0.0
    %1198 = vmatpush1.msra.mxu0 0.0
    %1199 = vmatprep.subr.mxu0 0.0
    %1200 = vmatpush1.msra.mxu0 0.0
    %1201 = vmatprep.subr.mxu0 0.0
    %1202 = vmatpush1.msra.mxu0 0.0
    %1203 = vmatprep.subr.mxu0 0.0
    %1204 = vmatpush1.msra.mxu0 0.0
    %1205 = vmatprep.subr.mxu0 0.0
    %1206 = vmatpush1.msra.mxu0 0.0
    %1207 = vmatprep.subr.mxu0 0.0
    %1208 = vmatpush1.msra.mxu0 0.0
    %1209 = vmatprep.subr.mxu0 0.0
    %1210 = vmatpush1.msra.mxu0 0.0
    %1211 = vmatprep.subr.mxu0 0.0
    %1212 = vmatpush1.msra.mxu0 0.0
    %1213 = vmatprep.subr.mxu0 0.0
    %1214 = vmatpush1.msra.mxu0 0.0
    %1215 = vmatprep.subr.mxu0 0.0
    %1216 = vmatpush1.msra.mxu0 0.0
    %1217 = vmatprep.subr.mxu0 0.0
    %1218 = vmatpush1.msra.mxu0 0.0
    %1219 = vmatprep.subr.mxu0 0.0
    %1220 = vmatpush1.msra.mxu0 0.0
    %1221 = vmatprep.subr.mxu0 0.0
    %1222 = vmatpush1.msra.mxu0 0.0
    %1223 = vmatprep.subr.mxu0 0.0
    %1224 = vmatpush1.msra.mxu0 0.0
    %1225 = vmatprep.subr.mxu0 0.0
    %1226 = vmatpush1.msra.mxu0 0.0
    %1227 = vmatprep.subr.mxu0 0.0
    %1228 = vmatpush1.msra.mxu0 0.0
    %1229 = vmatprep.subr.mxu0 0.0
    %1230 = vmatpush1.msra.mxu0 0.0
    %1231 = vmatprep.subr.mxu0 0.0
    %1232 = vmatpush1.msra.mxu0 0.0
    %1233 = vmatprep.subr.mxu0 0.0
    %1234 = vmatpush1.msra.mxu0 0.0
    %1235 = vmatprep.subr.mxu0 0.0
    %1236 = vmatpush1.msra.mxu0 0.0
    %1237 = vmatprep.subr.mxu0 0.0
    %1238 = vmatpush1.msra.mxu0 0.0
    %1239 = vmatprep.subr.mxu0 0.0
    %1240 = vmatpush1.msra.mxu0 0.0
    %1241 = vmatprep.subr.mxu0 0.0
    %1242 = vmatpush1.msra.mxu0 0.0
    %1243 = vmatprep.subr.mxu0 0.0
    %1244 = vmatpush1.msra.mxu0 0.0
    %1245 = vmatprep.subr.mxu0 0.0
    %1246 = vmatpush1.msra.mxu0 0.0
    %1247 = vmatprep.mubr.f32.mxu0 0.0
    %1248 = vmatmul.mubr.f32.gmra.mrb[0].mxu0 %v198
    %v1249 = vpop.f32.mrb[0].mxu0
    %v1250 = vadd.f32 0.0, %v1249
    %v1251 = vpop.f32.mrb[0].mxu0
    %1252 = vdwg.mxu0
    %v1253 = vadd.f32 %v1182, %v1250
    %v1254 = vxor.u32 %v1253, 2147483648
    %v1255 = vmul.f32 %v1254, 1.442695
    %v1256 = vpow.pop %v1255
    %v1257 = vadd.f32 %v1256, 1.0
    %v1258 = vrcp.pop %v1257
    %v1259 = vmul.f32 1.0, %v1258
    %v1260 = vtanh.pop %v1253
    %v1261 = vmul.f32 %v1259, 0.0
    %1263 = vrot.lane.b32.xlu0 %v1260, 64
    %v1264 = vpop.permute.xlu0 %1263
    %v1266 = vmul.f32 %v1259, %v1264
    %1268 = vrot.lane.b32.xlu0 %v1266, 32
    %v1269 = vpop.permute.xlu0 %1268
    %v1271 = vadd.f32 %v1261, %v1269
    %v1272 = vtanh.pop %v1271
    %1274 = vrot.lane.b32.xlu0 %v1272, 64
    %v1275 = vpop.permute.xlu0 %1274
    %v1277 = vmul.f32 %v1259, %v1275
    %v1278 = vld [vmem:[#allocation2 + $0x8] sm:$0xff]
    %1280 = vrot.lane.b32.xlu0 %v1277, 32
    %v1281 = vpop.permute.xlu0 %1280
    %v1282 = vsel %vm196, %v1281, 0
    %1284 = vmatprep.subr.mxu0 0.0
    %1285 = vmatpush1.msra.mxu0 %v1178
    %1286 = vmatprep.subr.mxu0 0.0
    %1287 = vmatpush1.msra.mxu0 %v1179
    %1288 = vmatprep.subr.mxu0 0.0
    %1289 = vmatpush1.msra.mxu0 %v1180
    %1290 = vmatprep.subr.mxu0 0.0
    %1291 = vmatpush1.msra.mxu0 %v1181
    %1292 = vmatprep.subr.mxu0 0.0
    %1293 = vmatpush1.msra.mxu0 0.0
    %1294 = vmatprep.subr.mxu0 0.0
    %1295 = vmatpush1.msra.mxu0 0.0
    %1296 = vmatprep.subr.mxu0 0.0
    %1297 = vmatpush1.msra.mxu0 0.0
    %1298 = vmatprep.subr.mxu0 0.0
    %1299 = vmatpush1.msra.mxu0 0.0
    %1300 = vmatprep.subr.mxu0 0.0
    %1301 = vmatpush1.msra.mxu0 0.0
    %1302 = vmatprep.subr.mxu0 0.0
    %1303 = vmatpush1.msra.mxu0 0.0
    %1304 = vmatprep.subr.mxu0 0.0
    %1305 = vmatpush1.msra.mxu0 0.0
    %1306 = vmatprep.subr.mxu0 0.0
    %1307 = vmatpush1.msra.mxu0 0.0
    %1308 = vmatprep.subr.mxu0 0.0
    %1309 = vmatpush1.msra.mxu0 0.0
    %1310 = vmatprep.subr.mxu0 0.0
    %1311 = vmatpush1.msra.mxu0 0.0
    %1312 = vmatprep.subr.mxu0 0.0
    %1313 = vmatpush1.msra.mxu0 0.0
    %1314 = vmatprep.subr.mxu0 0.0
    %1315 = vmatpush1.msra.mxu0 0.0
    %1316 = vmatprep.subr.mxu0 0.0
    %1317 = vmatpush1.msra.mxu0 0.0
    %1318 = vmatprep.subr.mxu0 0.0
    %1319 = vmatpush1.msra.mxu0 0.0
    %1320 = vmatprep.subr.mxu0 0.0
    %1321 = vmatpush1.msra.mxu0 0.0
    %1322 = vmatprep.subr.mxu0 0.0
    %1323 = vmatpush1.msra.mxu0 0.0
    %1324 = vmatprep.subr.mxu0 0.0
    %1325 = vmatpush1.msra.mxu0 0.0
    %1326 = vmatprep.subr.mxu0 0.0
    %1327 = vmatpush1.msra.mxu0 0.0
    %1328 = vmatprep.subr.mxu0 0.0
    %1329 = vmatpush1.msra.mxu0 0.0
    %1330 = vmatprep.subr.mxu0 0.0
    %1331 = vmatpush1.msra.mxu0 0.0
    %1332 = vmatprep.subr.mxu0 0.0
    %1333 = vmatpush1.msra.mxu0 0.0
    %1334 = vmatprep.subr.mxu0 0.0
    %1335 = vmatpush1.msra.mxu0 0.0
    %1336 = vmatprep.subr.mxu0 0.0
    %1337 = vmatpush1.msra.mxu0 0.0
    %1338 = vmatprep.subr.mxu0 0.0
    %1339 = vmatpush1.msra.mxu0 0.0
    %1340 = vmatprep.subr.mxu0 0.0
    %1341 = vmatpush1.msra.mxu0 0.0
    %1342 = vmatprep.subr.mxu0 0.0
    %1343 = vmatpush1.msra.mxu0 0.0
    %1344 = vmatprep.subr.mxu0 0.0
    %1345 = vmatpush1.msra.mxu0 0.0
    %1346 = vmatprep.subr.mxu0 0.0
    %1347 = vmatpush1.msra.mxu0 0.0
    %1348 = vmatprep.mubr.f32.mxu0 0.0
    %1349 = vmatmul.mubr.f32.gmra.mrb[0].mxu0 %v1282
    %v1350 = vpop.f32.mrb[0].mxu0
    %v1351 = vadd.f32 0.0, %v1350
    %v1352 = vpop.f32.mrb[0].mxu0
    %1353 = vdwg.mxu0
    %v1354 = vadd.f32 %v1278, %v1351
    %v1355 = vxor.u32 %v1354, 2147483648
    %v1356 = vmul.f32 %v1355, 1.442695
    %v1357 = vpow.pop %v1356
    %v1358 = vadd.f32 %v1357, 1.0
    %v1359 = vrcp.pop %v1358
    %v1360 = vmul.f32 1.0, %v1359
    %v1361 = vtanh.pop %v1354
    %v1362 = vmul.f32 %v1360, %v1271
    %1364 = vrot.lane.b32.xlu0 %v1361, 64
    %v1365 = vpop.permute.xlu0 %1364
    %v1367 = vmul.f32 %v1360, %v1365
    %1369 = vrot.lane.b32.xlu0 %v1367, 32
    %v1370 = vpop.permute.xlu0 %1369
    %v1372 = vadd.f32 %v1362, %v1370
    %v1373 = vtanh.pop %v1372
    %1375 = vrot.lane.b32.xlu0 %v1373, 64
    %v1376 = vpop.permute.xlu0 %1375
    %v1378 = vmul.f32 %v1360, %v1376
    %v1379 = vld [vmem:[#allocation2 + $0x10] sm:$0xff]
    %1381 = vrot.lane.b32.xlu0 %v1378, 32
    %v1382 = vpop.permute.xlu0 %1381
    %v1383 = vsel %vm196, %v1382, 0
    %1385 = vmatprep.subr.mxu0 0.0
    %1386 = vmatpush1.msra.mxu0 %v1178
    %1387 = vmatprep.subr.mxu0 0.0
    %1388 = vmatpush1.msra.mxu0 %v1179
    %1389 = vmatprep.subr.mxu0 0.0
    %1390 = vmatpush1.msra.mxu0 %v1180
    %1391 = vmatprep.subr.mxu0 0.0
    %1392 = vmatpush1.msra.mxu0 %v1181
    %1393 = vmatprep.subr.mxu0 0.0
    %1394 = vmatpush1.msra.mxu0 0.0
    %1395 = vmatprep.subr.mxu0 0.0
    %1396 = vmatpush1.msra.mxu0 0.0
    %1397 = vmatprep.subr.mxu0 0.0
    %1398 = vmatpush1.msra.mxu0 0.0
    %1399 = vmatprep.subr.mxu0 0.0
    %1400 = vmatpush1.msra.mxu0 0.0
    %1401 = vmatprep.subr.mxu0 0.0
    %1402 = vmatpush1.msra.mxu0 0.0
    %1403 = vmatprep.subr.mxu0 0.0
    %1404 = vmatpush1.msra.mxu0 0.0
    %1405 = vmatprep.subr.mxu0 0.0
    %1406 = vmatpush1.msra.mxu0 0.0
    %1407 = vmatprep.subr.mxu0 0.0
    %1408 = vmatpush1.msra.mxu0 0.0
    %1409 = vmatprep.subr.mxu0 0.0
    %1410 = vmatpush1.msra.mxu0 0.0
    %1411 = vmatprep.subr.mxu0 0.0
    %1412 = vmatpush1.msra.mxu0 0.0
    %1413 = vmatprep.subr.mxu0 0.0
    %1414 = vmatpush1.msra.mxu0 0.0
    %1415 = vmatprep.subr.mxu0 0.0
    %1416 = vmatpush1.msra.mxu0 0.0
    %1417 = vmatprep.subr.mxu0 0.0
    %1418 = vmatpush1.msra.mxu0 0.0
    %1419 = vmatprep.subr.mxu0 0.0
    %1420 = vmatpush1.msra.mxu0 0.0
    %1421 = vmatprep.subr.mxu0 0.0
    %1422 = vmatpush1.msra.mxu0 0.0
    %1423 = vmatprep.subr.mxu0 0.0
    %1424 = vmatpush1.msra.mxu0 0.0
    %1425 = vmatprep.subr.mxu0 0.0
    %1426 = vmatpush1.msra.mxu0 0.0
    %1427 = vmatprep.subr.mxu0 0.0
    %1428 = vmatpush1.msra.mxu0 0.0
    %1429 = vmatprep.subr.mxu0 0.0
    %1430 = vmatpush1.msra.mxu0 0.0
    %1431 = vmatprep.subr.mxu0 0.0
    %1432 = vmatpush1.msra.mxu0 0.0
    %1433 = vmatprep.subr.mxu0 0.0
    %1434 = vmatpush1.msra.mxu0 0.0
    %1435 = vmatprep.subr.mxu0 0.0
    %1436 = vmatpush1.msra.mxu0 0.0
    %1437 = vmatprep.subr.mxu0 0.0
    %1438 = vmatpush1.msra.mxu0 0.0
    %1439 = vmatprep.subr.mxu0 0.0
    %1440 = vmatpush1.msra.mxu0 0.0
    %1441 = vmatprep.subr.mxu0 0.0
    %1442 = vmatpush1.msra.mxu0 0.0
    %1443 = vmatprep.subr.mxu0 0.0
    %1444 = vmatpush1.msra.mxu0 0.0
    %1445 = vmatprep.subr.mxu0 0.0
    %1446 = vmatpush1.msra.mxu0 0.0
    %1447 = vmatprep.subr.mxu0 0.0
    %1448 = vmatpush1.msra.mxu0 0.0
    %1449 = vmatprep.mubr.f32.mxu0 0.0
    %1450 = vmatmul.mubr.f32.gmra.mrb[0].mxu0 %v1383
    %v1451 = vpop.f32.mrb[0].mxu0
    %v1452 = vadd.f32 0.0, %v1451
    %v1453 = vpop.f32.mrb[0].mxu0
    %1454 = vdwg.mxu0
    %v1455 = vadd.f32 %v1379, %v1452
    %v1456 = vxor.u32 %v1455, 2147483648
    %v1457 = vmul.f32 %v1456, 1.442695
    %v1458 = vpow.pop %v1457
    %v1459 = vadd.f32 %v1458, 1.0
    %v1460 = vrcp.pop %v1459
    %v1461 = vmul.f32 1.0, %v1460
    %v1462 = vtanh.pop %v1455
    %v1463 = vmul.f32 %v1461, %v1372
    %1465 = vrot.lane.b32.xlu0 %v1462, 64
    %v1466 = vpop.permute.xlu0 %1465
    %v1468 = vmul.f32 %v1461, %v1466
    %1470 = vrot.lane.b32.xlu0 %v1468, 32
    %v1471 = vpop.permute.xlu0 %1470
    %v1473 = vadd.f32 %v1463, %v1471
    %v1474 = vtanh.pop %v1473
    %1476 = vrot.lane.b32.xlu0 %v1474, 64
    %v1477 = vpop.permute.xlu0 %1476
    %v1479 = vmul.f32 %v1461, %v1477
    %v1480 = vld [vmem:[#allocation2 + $0x18] sm:$0xff]
    %1482 = vrot.lane.b32.xlu0 %v1479, 32
    %v1483 = vpop.permute.xlu0 %1482
    %v1484 = vsel %vm196, %v1483, 0
    %1486 = vmatprep.subr.mxu0 0.0
    %1487 = vmatpush1.msra.mxu0 %v1178
    %1488 = vmatprep.subr.mxu0 0.0
    %1489 = vmatpush1.msra.mxu0 %v1179
    %1490 = vmatprep.subr.mxu0 0.0
    %1491 = vmatpush1.msra.mxu0 %v1180
    %1492 = vmatprep.subr.mxu0 0.0
    %1493 = vmatpush1.msra.mxu0 %v1181
    %1494 = vmatprep.subr.mxu0 0.0
    %1495 = vmatpush1.msra.mxu0 0.0
    %1496 = vmatprep.subr.mxu0 0.0
    %1497 = vmatpush1.msra.mxu0 0.0
    %1498 = vmatprep.subr.mxu0 0.0
    %1499 = vmatpush1.msra.mxu0 0.0
    %1500 = vmatprep.subr.mxu0 0.0
    %1501 = vmatpush1.msra.mxu0 0.0
    %1502 = vmatprep.subr.mxu0 0.0
    %1503 = vmatpush1.msra.mxu0 0.0
    %1504 = vmatprep.subr.mxu0 0.0
    %1505 = vmatpush1.msra.mxu0 0.0
    %1506 = vmatprep.subr.mxu0 0.0
    %1507 = vmatpush1.msra.mxu0 0.0
    %1508 = vmatprep.subr.mxu0 0.0
    %1509 = vmatpush1.msra.mxu0 0.0
    %1510 = vmatprep.subr.mxu0 0.0
    %1511 = vmatpush1.msra.mxu0 0.0
    %1512 = vmatprep.subr.mxu0 0.0
    %1513 = vmatpush1.msra.mxu0 0.0
    %1514 = vmatprep.subr.mxu0 0.0
    %1515 = vmatpush1.msra.mxu0 0.0
    %1516 = vmatprep.subr.mxu0 0.0
    %1517 = vmatpush1.msra.mxu0 0.0
    %1518 = vmatprep.subr.mxu0 0.0
    %1519 = vmatpush1.msra.mxu0 0.0
    %1520 = vmatprep.subr.mxu0 0.0
    %1521 = vmatpush1.msra.mxu0 0.0
    %1522 = vmatprep.subr.mxu0 0.0
    %1523 = vmatpush1.msra.mxu0 0.0
    %1524 = vmatprep.subr.mxu0 0.0
    %1525 = vmatpush1.msra.mxu0 0.0
    %1526 = vmatprep.subr.mxu0 0.0
    %1527 = vmatpush1.msra.mxu0 0.0
    %1528 = vmatprep.subr.mxu0 0.0
    %1529 = vmatpush1.msra.mxu0 0.0
    %1530 = vmatprep.subr.mxu0 0.0
    %1531 = vmatpush1.msra.mxu0 0.0
    %1532 = vmatprep.subr.mxu0 0.0
    %1533 = vmatpush1.msra.mxu0 0.0
    %1534 = vmatprep.subr.mxu0 0.0
    %1535 = vmatpush1.msra.mxu0 0.0
    %1536 = vmatprep.subr.mxu0 0.0
    %1537 = vmatpush1.msra.mxu0 0.0
    %1538 = vmatprep.subr.mxu0 0.0
    %1539 = vmatpush1.msra.mxu0 0.0
    %1540 = vmatprep.subr.mxu0 0.0
    %1541 = vmatpush1.msra.mxu0 0.0
    %1542 = vmatprep.subr.mxu0 0.0
    %1543 = vmatpush1.msra.mxu0 0.0
    %1544 = vmatprep.subr.mxu0 0.0
    %1545 = vmatpush1.msra.mxu0 0.0
    %1546 = vmatprep.subr.mxu0 0.0
    %1547 = vmatpush1.msra.mxu0 0.0
    %1548 = vmatprep.subr.mxu0 0.0
    %1549 = vmatpush1.msra.mxu0 0.0
    %1550 = vmatprep.mubr.f32.mxu0 0.0
    %1551 = vmatmul.mubr.f32.gmra.mrb[0].mxu0 %v1484
    %v1552 = vpop.f32.mrb[0].mxu0
    %v1553 = vadd.f32 0.0, %v1552
    %v1554 = vpop.f32.mrb[0].mxu0
    %1555 = vdwg.mxu0
    %v1556 = vadd.f32 %v1480, %v1553
    %v1557 = vxor.u32 %v1556, 2147483648
    %v1558 = vmul.f32 %v1557, 1.442695
    %v1559 = vpow.pop %v1558
    %v1560 = vadd.f32 %v1559, 1.0
    %v1561 = vrcp.pop %v1560
    %v1562 = vmul.f32 1.0, %v1561
    %v1563 = vtanh.pop %v1556
    %v1564 = vmul.f32 %v1562, %v1473
    %1566 = vrot.lane.b32.xlu0 %v1563, 64
    %v1567 = vpop.permute.xlu0 %1566
    %v1569 = vmul.f32 %v1562, %v1567
    %1571 = vrot.lane.b32.xlu0 %v1569, 32
    %v1572 = vpop.permute.xlu0 %1571
    %v1574 = vadd.f32 %v1564, %v1572
    %v1575 = vtanh.pop %v1574
    %1577 = vrot.lane.b32.xlu0 %v1575, 64
    %v1578 = vpop.permute.xlu0 %1577
    %v1580 = vmul.f32 %v1562, %v1578
    %v1581 = vld [vmem:[#allocation2 + $0x20] sm:$0xff]
    %1583 = vrot.lane.b32.xlu0 %v1580, 32
    %v1584 = vpop.permute.xlu0 %1583
    %v1585 = vsel %vm196, %v1584, 0
    %1587 = vmatprep.subr.mxu0 0.0
    %1588 = vmatpush1.msra.mxu0 %v1178
    %1589 = vmatprep.subr.mxu0 0.0
    %1590 = vmatpush1.msra.mxu0 %v1179
    %1591 = vmatprep.subr.mxu0 0.0
    %1592 = vmatpush1.msra.mxu0 %v1180
    %1593 = vmatprep.subr.mxu0 0.0
    %1594 = vmatpush1.msra.mxu0 %v1181
    %1595 = vmatprep.subr.mxu0 0.0
    %1596 = vmatpush1.msra.mxu0 0.0
    %1597 = vmatprep.subr.mxu0 0.0
    %1598 = vmatpush1.msra.mxu0 0.0
    %1599 = vmatprep.subr.mxu0 0.0
    %1600 = vmatpush1.msra.mxu0 0.0
    %1601 = vmatprep.subr.mxu0 0.0
    %1602 = vmatpush1.msra.mxu0 0.0
    %1603 = vmatprep.subr.mxu0 0.0
    %1604 = vmatpush1.msra.mxu0 0.0
    %1605 = vmatprep.subr.mxu0 0.0
    %1606 = vmatpush1.msra.mxu0 0.0
    %1607 = vmatprep.subr.mxu0 0.0
    %1608 = vmatpush1.msra.mxu0 0.0
    %1609 = vmatprep.subr.mxu0 0.0
    %1610 = vmatpush1.msra.mxu0 0.0
    %1611 = vmatprep.subr.mxu0 0.0
    %1612 = vmatpush1.msra.mxu0 0.0
    %1613 = vmatprep.subr.mxu0 0.0
    %1614 = vmatpush1.msra.mxu0 0.0
    %1615 = vmatprep.subr.mxu0 0.0
    %1616 = vmatpush1.msra.mxu0 0.0
    %1617 = vmatprep.subr.mxu0 0.0
    %1618 = vmatpush1.msra.mxu0 0.0
    %1619 = vmatprep.subr.mxu0 0.0
    %1620 = vmatpush1.msra.mxu0 0.0
    %1621 = vmatprep.subr.mxu0 0.0
    %1622 = vmatpush1.msra.mxu0 0.0
    %1623 = vmatprep.subr.mxu0 0.0
    %1624 = vmatpush1.msra.mxu0 0.0
    %1625 = vmatprep.subr.mxu0 0.0
    %1626 = vmatpush1.msra.mxu0 0.0
    %1627 = vmatprep.subr.mxu0 0.0
    %1628 = vmatpush1.msra.mxu0 0.0
    %1629 = vmatprep.subr.mxu0 0.0
    %1630 = vmatpush1.msra.mxu0 0.0
    %1631 = vmatprep.subr.mxu0 0.0
    %1632 = vmatpush1.msra.mxu0 0.0
    %1633 = vmatprep.subr.mxu0 0.0
    %1634 = vmatpush1.msra.mxu0 0.0
    %1635 = vmatprep.subr.mxu0 0.0
    %1636 = vmatpush1.msra.mxu0 0.0
    %1637 = vmatprep.subr.mxu0 0.0
    %1638 = vmatpush1.msra.mxu0 0.0
    %1639 = vmatprep.subr.mxu0 0.0
    %1640 = vmatpush1.msra.mxu0 0.0
    %1641 = vmatprep.subr.mxu0 0.0
    %1642 = vmatpush1.msra.mxu0 0.0
    %1643 = vmatprep.subr.mxu0 0.0
    %1644 = vmatpush1.msra.mxu0 0.0
    %1645 = vmatprep.subr.mxu0 0.0
    %1646 = vmatpush1.msra.mxu0 0.0
    %1647 = vmatprep.subr.mxu0 0.0
    %1648 = vmatpush1.msra.mxu0 0.0
    %1649 = vmatprep.subr.mxu0 0.0
    %1650 = vmatpush1.msra.mxu0 0.0
    %1651 = vmatprep.mubr.f32.mxu0 0.0
    %1652 = vmatmul.mubr.f32.gmra.mrb[0].mxu0 %v1585
    %v1653 = vpop.f32.mrb[0].mxu0
    %v1654 = vadd.f32 0.0, %v1653
    %v1655 = vpop.f32.mrb[0].mxu0
    %1656 = vdwg.mxu0
    %v1657 = vadd.f32 %v1581, %v1654
    %v1658 = vxor.u32 %v1657, 2147483648
    %v1659 = vmul.f32 %v1658, 1.442695
    %v1660 = vpow.pop %v1659
    %v1661 = vadd.f32 %v1660, 1.0
    %v1662 = vrcp.pop %v1661
    %v1663 = vmul.f32 1.0, %v1662
    %v1664 = vtanh.pop %v1657
    %v1665 = vmul.f32 %v1663, %v1574
    %1667 = vrot.lane.b32.xlu0 %v1664, 64
    %v1668 = vpop.permute.xlu0 %1667
    %v1670 = vmul.f32 %v1663, %v1668
    %1672 = vrot.lane.b32.xlu0 %v1670, 32
    %v1673 = vpop.permute.xlu0 %1672
    %v1675 = vadd.f32 %v1665, %v1673
    %v1676 = vtanh.pop %v1675
    %1678 = vrot.lane.b32.xlu0 %v1676, 64
    %v1679 = vpop.permute.xlu0 %1678
    %v1681 = vmul.f32 %v1663, %v1679
    %v1682 = vld [vmem:[#allocation2 + $0x28] sm:$0xff]
    %1684 = vrot.lane.b32.xlu0 %v1681, 32
    %v1685 = vpop.permute.xlu0 %1684
    %v1686 = vsel %vm196, %v1685, 0
    %1688 = vmatprep.subr.mxu0 0.0
    %1689 = vmatpush1.msra.mxu0 %v1178
    %1690 = vmatprep.subr.mxu0 0.0
    %1691 = vmatpush1.msra.mxu0 %v1179
    %1692 = vmatprep.subr.mxu0 0.0
    %1693 = vmatpush1.msra.mxu0 %v1180
    %1694 = vmatprep.subr.mxu0 0.0
    %1695 = vmatpush1.msra.mxu0 %v1181
    %1696 = vmatprep.subr.mxu0 0.0
    %1697 = vmatpush1.msra.mxu0 0.0
    %1698 = vmatprep.subr.mxu0 0.0
    %1699 = vmatpush1.msra.mxu0 0.0
    %1700 = vmatprep.subr.mxu0 0.0
    %1701 = vmatpush1.msra.mxu0 0.0
    %1702 = vmatprep.subr.mxu0 0.0
    %1703 = vmatpush1.msra.mxu0 0.0
    %1704 = vmatprep.subr.mxu0 0.0
    %1705 = vmatpush1.msra.mxu0 0.0
    %1706 = vmatprep.subr.mxu0 0.0
    %1707 = vmatpush1.msra.mxu0 0.0
    %1708 = vmatprep.subr.mxu0 0.0
    %1709 = vmatpush1.msra.mxu0 0.0
    %1710 = vmatprep.subr.mxu0 0.0
    %1711 = vmatpush1.msra.mxu0 0.0
    %1712 = vmatprep.subr.mxu0 0.0
    %1713 = vmatpush1.msra.mxu0 0.0
    %1714 = vmatprep.subr.mxu0 0.0
    %1715 = vmatpush1.msra.mxu0 0.0
    %1716 = vmatprep.subr.mxu0 0.0
    %1717 = vmatpush1.msra.mxu0 0.0
    %1718 = vmatprep.subr.mxu0 0.0
    %1719 = vmatpush1.msra.mxu0 0.0
    %1720 = vmatprep.subr.mxu0 0.0
    %1721 = vmatpush1.msra.mxu0 0.0
    %1722 = vmatprep.subr.mxu0 0.0
    %1723 = vmatpush1.msra.mxu0 0.0
    %1724 = vmatprep.subr.mxu0 0.0
    %1725 = vmatpush1.msra.mxu0 0.0
    %1726 = vmatprep.subr.mxu0 0.0
    %1727 = vmatpush1.msra.mxu0 0.0
    %1728 = vmatprep.subr.mxu0 0.0
    %1729 = vmatpush1.msra.mxu0 0.0
    %1730 = vmatprep.subr.mxu0 0.0
    %1731 = vmatpush1.msra.mxu0 0.0
    %1732 = vmatprep.subr.mxu0 0.0
    %1733 = vmatpush1.msra.mxu0 0.0
    %1734 = vmatprep.subr.mxu0 0.0
    %1735 = vmatpush1.msra.mxu0 0.0
    %1736 = vmatprep.subr.mxu0 0.0
    %1737 = vmatpush1.msra.mxu0 0.0
    %1738 = vmatprep.subr.mxu0 0.0
    %1739 = vmatpush1.msra.mxu0 0.0
    %1740 = vmatprep.subr.mxu0 0.0
    %1741 = vmatpush1.msra.mxu0 0.0
    %1742 = vmatprep.subr.mxu0 0.0
    %1743 = vmatpush1.msra.mxu0 0.0
    %1744 = vmatprep.subr.mxu0 0.0
    %1745 = vmatpush1.msra.mxu0 0.0
    %1746 = vmatprep.subr.mxu0 0.0
    %1747 = vmatpush1.msra.mxu0 0.0
    %1748 = vmatprep.subr.mxu0 0.0
    %1749 = vmatpush1.msra.mxu0 0.0
    %1750 = vmatprep.subr.mxu0 0.0
    %1751 = vmatpush1.msra.mxu0 0.0
    %1752 = vmatprep.mubr.f32.mxu0 0.0
    %1753 = vmatmul.mubr.f32.gmra.mrb[0].mxu0 %v1686
    %v1754 = vpop.f32.mrb[0].mxu0
    %v1755 = vadd.f32 0.0, %v1754
    %v1756 = vpop.f32.mrb[0].mxu0
    %1757 = vdwg.mxu0
    %v1758 = vadd.f32 %v1682, %v1755
    %v1759 = vxor.u32 %v1758, 2147483648
    %v1760 = vmul.f32 %v1759, 1.442695
    %v1761 = vpow.pop %v1760
    %v1762 = vadd.f32 %v1761, 1.0
    %v1763 = vrcp.pop %v1762
    %v1764 = vmul.f32 1.0, %v1763
    %v1765 = vtanh.pop %v1758
    %v1766 = vmul.f32 %v1764, %v1675
    %1768 = vrot.lane.b32.xlu0 %v1765, 64
    %v1769 = vpop.permute.xlu0 %1768
    %v1771 = vmul.f32 %v1764, %v1769
    %1773 = vrot.lane.b32.xlu0 %v1771, 32
    %v1774 = vpop.permute.xlu0 %1773
    %v1776 = vadd.f32 %v1766, %v1774
    %v1777 = vtanh.pop %v1776
    %1779 = vrot.lane.b32.xlu0 %v1777, 64
    %v1780 = vpop.permute.xlu0 %1779
    %v1782 = vmul.f32 %v1764, %v1780
    %v1783 = vld [vmem:[#allocation2 + $0x30] sm:$0xff]
    %1785 = vrot.lane.b32.xlu0 %v1782, 32
    %v1786 = vpop.permute.xlu0 %1785
    %v1787 = vsel %vm196, %v1786, 0
    %1789 = vmatprep.subr.mxu0 0.0
    %1790 = vmatpush1.msra.mxu0 %v1178
    %1791 = vmatprep.subr.mxu0 0.0
    %1792 = vmatpush1.msra.mxu0 %v1179
    %1793 = vmatprep.subr.mxu0 0.0
    %1794 = vmatpush1.msra.mxu0 %v1180
    %1795 = vmatprep.subr.mxu0 0.0
    %1796 = vmatpush1.msra.mxu0 %v1181
    %1797 = vmatprep.subr.mxu0 0.0
    %1798 = vmatpush1.msra.mxu0 0.0
    %1799 = vmatprep.subr.mxu0 0.0
    %1800 = vmatpush1.msra.mxu0 0.0
    %1801 = vmatprep.subr.mxu0 0.0
    %1802 = vmatpush1.msra.mxu0 0.0
    %1803 = vmatprep.subr.mxu0 0.0
    %1804 = vmatpush1.msra.mxu0 0.0
    %1805 = vmatprep.subr.mxu0 0.0
    %1806 = vmatpush1.msra.mxu0 0.0
    %1807 = vmatprep.subr.mxu0 0.0
    %1808 = vmatpush1.msra.mxu0 0.0
    %1809 = vmatprep.subr.mxu0 0.0
    %1810 = vmatpush1.msra.mxu0 0.0
    %1811 = vmatprep.subr.mxu0 0.0
    %1812 = vmatpush1.msra.mxu0 0.0
    %1813 = vmatprep.subr.mxu0 0.0
    %1814 = vmatpush1.msra.mxu0 0.0
    %1815 = vmatprep.subr.mxu0 0.0
    %1816 = vmatpush1.msra.mxu0 0.0
    %1817 = vmatprep.subr.mxu0 0.0
    %1818 = vmatpush1.msra.mxu0 0.0
    %1819 = vmatprep.subr.mxu0 0.0
    %1820 = vmatpush1.msra.mxu0 0.0
    %1821 = vmatprep.subr.mxu0 0.0
    %1822 = vmatpush1.msra.mxu0 0.0
    %1823 = vmatprep.subr.mxu0 0.0
    %1824 = vmatpush1.msra.mxu0 0.0
    %1825 = vmatprep.subr.mxu0 0.0
    %1826 = vmatpush1.msra.mxu0 0.0
    %1827 = vmatprep.subr.mxu0 0.0
    %1828 = vmatpush1.msra.mxu0 0.0
    %1829 = vmatprep.subr.mxu0 0.0
    %1830 = vmatpush1.msra.mxu0 0.0
    %1831 = vmatprep.subr.mxu0 0.0
    %1832 = vmatpush1.msra.mxu0 0.0
    %1833 = vmatprep.subr.mxu0 0.0
    %1834 = vmatpush1.msra.mxu0 0.0
    %1835 = vmatprep.subr.mxu0 0.0
    %1836 = vmatpush1.msra.mxu0 0.0
    %1837 = vmatprep.subr.mxu0 0.0
    %1838 = vmatpush1.msra.mxu0 0.0
    %1839 = vmatprep.subr.mxu0 0.0
    %1840 = vmatpush1.msra.mxu0 0.0
    %1841 = vmatprep.subr.mxu0 0.0
    %1842 = vmatpush1.msra.mxu0 0.0
    %1843 = vmatprep.subr.mxu0 0.0
    %1844 = vmatpush1.msra.mxu0 0.0
    %1845 = vmatprep.subr.mxu0 0.0
    %1846 = vmatpush1.msra.mxu0 0.0
    %1847 = vmatprep.subr.mxu0 0.0
    %1848 = vmatpush1.msra.mxu0 0.0
    %1849 = vmatprep.subr.mxu0 0.0
    %1850 = vmatpush1.msra.mxu0 0.0
    %1851 = vmatprep.subr.mxu0 0.0
    %1852 = vmatpush1.msra.mxu0 0.0
    %1853 = vmatprep.mubr.f32.mxu0 0.0
    %1854 = vmatmul.mubr.f32.gmra.mrb[0].mxu0 %v1787
    %v1855 = vpop.f32.mrb[0].mxu0
    %v1856 = vadd.f32 0.0, %v1855
    %v1857 = vpop.f32.mrb[0].mxu0
    %1858 = vdwg.mxu0
    %v1859 = vadd.f32 %v1783, %v1856
    %v1860 = vxor.u32 %v1859, 2147483648
    %v1861 = vmul.f32 %v1860, 1.442695
    %v1862 = vpow.pop %v1861
    %v1863 = vadd.f32 %v1862, 1.0
    %v1864 = vrcp.pop %v1863
    %v1865 = vmul.f32 1.0, %v1864
    %v1866 = vtanh.pop %v1859
    %v1867 = vmul.f32 %v1865, %v1776
    %1869 = vrot.lane.b32.xlu0 %v1866, 64
    %v1870 = vpop.permute.xlu0 %1869
    %v1872 = vmul.f32 %v1865, %v1870
    %1874 = vrot.lane.b32.xlu0 %v1872, 32
    %v1875 = vpop.permute.xlu0 %1874
    %v1877 = vadd.f32 %v1867, %v1875
    %v1878 = vtanh.pop %v1877
    %1880 = vrot.lane.b32.xlu0 %v1878, 64
    %v1881 = vpop.permute.xlu0 %1880
    %v1883 = vmul.f32 %v1865, %v1881
    %v1884 = vld [vmem:[#allocation2 + $0x38] sm:$0xff]
    %1886 = vrot.lane.b32.xlu0 %v1883, 32
    %v1887 = vpop.permute.xlu0 %1886
    %v1888 = vsel %vm196, %v1887, 0
    %1890 = vmatprep.subr.mxu0 0.0
    %1891 = vmatpush1.msra.mxu0 %v1178
    %1892 = vmatprep.subr.mxu0 0.0
    %1893 = vmatpush1.msra.mxu0 %v1179
    %1894 = vmatprep.subr.mxu0 0.0
    %1895 = vmatpush1.msra.mxu0 %v1180
    %1896 = vmatprep.subr.mxu0 0.0
    %1897 = vmatpush1.msra.mxu0 %v1181
    %1898 = vmatprep.subr.mxu0 0.0
    %1899 = vmatpush1.msra.mxu0 0.0
    %1900 = vmatprep.subr.mxu0 0.0
    %1901 = vmatpush1.msra.mxu0 0.0
    %1902 = vmatprep.subr.mxu0 0.0
    %1903 = vmatpush1.msra.mxu0 0.0
    %1904 = vmatprep.subr.mxu0 0.0
    %1905 = vmatpush1.msra.mxu0 0.0
    %1906 = vmatprep.subr.mxu0 0.0
    %1907 = vmatpush1.msra.mxu0 0.0
    %1908 = vmatprep.subr.mxu0 0.0
    %1909 = vmatpush1.msra.mxu0 0.0
    %1910 = vmatprep.subr.mxu0 0.0
    %1911 = vmatpush1.msra.mxu0 0.0
    %1912 = vmatprep.subr.mxu0 0.0
    %1913 = vmatpush1.msra.mxu0 0.0
    %1914 = vmatprep.subr.mxu0 0.0
    %1915 = vmatpush1.msra.mxu0 0.0
    %1916 = vmatprep.subr.mxu0 0.0
    %1917 = vmatpush1.msra.mxu0 0.0
    %1918 = vmatprep.subr.mxu0 0.0
    %1919 = vmatpush1.msra.mxu0 0.0
    %1920 = vmatprep.subr.mxu0 0.0
    %1921 = vmatpush1.msra.mxu0 0.0
    %1922 = vmatprep.subr.mxu0 0.0
    %1923 = vmatpush1.msra.mxu0 0.0
    %1924 = vmatprep.subr.mxu0 0.0
    %1925 = vmatpush1.msra.mxu0 0.0
    %1926 = vmatprep.subr.mxu0 0.0
    %1927 = vmatpush1.msra.mxu0 0.0
    %1928 = vmatprep.subr.mxu0 0.0
    %1929 = vmatpush1.msra.mxu0 0.0
    %1930 = vmatprep.subr.mxu0 0.0
    %1931 = vmatpush1.msra.mxu0 0.0
    %1932 = vmatprep.subr.mxu0 0.0
    %1933 = vmatpush1.msra.mxu0 0.0
    %1934 = vmatprep.subr.mxu0 0.0
    %1935 = vmatpush1.msra.mxu0 0.0
    %1936 = vmatprep.subr.mxu0 0.0
    %1937 = vmatpush1.msra.mxu0 0.0
    %1938 = vmatprep.subr.mxu0 0.0
    %1939 = vmatpush1.msra.mxu0 0.0
    %1940 = vmatprep.subr.mxu0 0.0
    %1941 = vmatpush1.msra.mxu0 0.0
    %1942 = vmatprep.subr.mxu0 0.0
    %1943 = vmatpush1.msra.mxu0 0.0
    %1944 = vmatprep.subr.mxu0 0.0
    %1945 = vmatpush1.msra.mxu0 0.0
    %1946 = vmatprep.subr.mxu0 0.0
    %1947 = vmatpush1.msra.mxu0 0.0
    %1948 = vmatprep.subr.mxu0 0.0
    %1949 = vmatpush1.msra.mxu0 0.0
    %1950 = vmatprep.subr.mxu0 0.0
    %1951 = vmatpush1.msra.mxu0 0.0
    %1952 = vmatprep.subr.mxu0 0.0
    %1953 = vmatpush1.msra.mxu0 0.0
    %1954 = vmatprep.mubr.f32.mxu0 0.0
    %1955 = vmatmul.mubr.f32.gmra.mrb[0].mxu0 %v1888
    %v1956 = vpop.f32.mrb[0].mxu0
    %v1957 = vadd.f32 0.0, %v1956
    %v1958 = vpop.f32.mrb[0].mxu0
    %1959 = vdwg.mxu0
    %v1960 = vadd.f32 %v1884, %v1957
    %v1961 = vxor.u32 %v1960, 2147483648
    %v1962 = vmul.f32 %v1961, 1.442695
    %v1963 = vpow.pop %v1962
    %v1964 = vadd.f32 %v1963, 1.0
    %v1965 = vrcp.pop %v1964
    %v1966 = vmul.f32 1.0, %v1965
    %v1967 = vtanh.pop %v1960
    %v1968 = vmul.f32 %v1966, %v1877
    %1970 = vrot.lane.b32.xlu0 %v1967, 64
    %v1971 = vpop.permute.xlu0 %1970
    %v1973 = vmul.f32 %v1966, %v1971
    %1975 = vrot.lane.b32.xlu0 %v1973, 32
    %v1976 = vpop.permute.xlu0 %1975
    %v1978 = vadd.f32 %v1968, %v1976
    %v1979 = vtanh.pop %v1978
    %1981 = vrot.lane.b32.xlu0 %v1979, 64
    %v1982 = vpop.permute.xlu0 %1981
    %v1984 = vmul.f32 %v1966, %v1982
    %1986 = vrot.lane.b32.xlu0 %v1984, 32
    %v1987 = vpop.permute.xlu0 %1986
    %s1989 = scalar_lea.vmem [#allocation6], 8
    %1990 = vst.msk [vmem:[%s1989] sm:$0xff] %vm196, %v1987
    %v1991 = vld [vmem:[%s7] sm:$0xff]
    %v1992 = vld [vmem:[%s7 + $0x8] sm:$0xff]
    %v1993 = vld [vmem:[%s7 + $0x10] sm:$0xff]
    %v1994 = vld [vmem:[%s7 + $0x18] sm:$0xff]
    %v1995 = vld [vmem:[%s8] sm:$0x1]
    %v1997 = vlaneseq
    %v1998 = vshrl.u32 %v1997, 7
    %v1999 = vsub.s32 0, %v1998
    %v2000 = vrot.slane %v1995, %v1999
    %v2002 = vsel %vm196, %v1987, 0
    %2004 = vmatprep.subr.mxu0 0.0
    %2005 = vmatpush1.msra.mxu0 %v1991
    %2006 = vmatprep.subr.mxu0 0.0
    %2007 = vmatpush1.msra.mxu0 %v1992
    %2008 = vmatprep.subr.mxu0 0.0
    %2009 = vmatpush1.msra.mxu0 %v1993
    %2010 = vmatprep.subr.mxu0 0.0
    %2011 = vmatpush1.msra.mxu0 %v1994
    %2012 = vmatprep.subr.mxu0 0.0
    %2013 = vmatpush1.msra.mxu0 0.0
    %2014 = vmatprep.subr.mxu0 0.0
    %2015 = vmatpush1.msra.mxu0 0.0
    %2016 = vmatprep.subr.mxu0 0.0
    %2017 = vmatpush1.msra.mxu0 0.0
    %2018 = vmatprep.subr.mxu0 0.0
    %2019 = vmatpush1.msra.mxu0 0.0
    %2020 = vmatprep.subr.mxu0 0.0
    %2021 = vmatpush1.msra.mxu0 0.0
    %2022 = vmatprep.subr.mxu0 0.0
    %2023 = vmatpush1.msra.mxu0 0.0
    %2024 = vmatprep.subr.mxu0 0.0
    %2025 = vmatpush1.msra.mxu0 0.0
    %2026 = vmatprep.subr.mxu0 0.0
    %2027 = vmatpush1.msra.mxu0 0.0
    %2028 = vmatprep.subr.mxu0 0.0
    %2029 = vmatpush1.msra.mxu0 0.0
    %2030 = vmatprep.subr.mxu0 0.0
    %2031 = vmatpush1.msra.mxu0 0.0
    %2032 = vmatprep.subr.mxu0 0.0
    %2033 = vmatpush1.msra.mxu0 0.0
    %2034 = vmatprep.subr.mxu0 0.0
    %2035 = vmatpush1.msra.mxu0 0.0
    %2036 = vmatprep.subr.mxu0 0.0
    %2037 = vmatpush1.msra.mxu0 0.0
    %2038 = vmatprep.subr.mxu0 0.0
    %2039 = vmatpush1.msra.mxu0 0.0
    %2040 = vmatprep.subr.mxu0 0.0
    %2041 = vmatpush1.msra.mxu0 0.0
    %2042 = vmatprep.subr.mxu0 0.0
    %2043 = vmatpush1.msra.mxu0 0.0
    %2044 = vmatprep.subr.mxu0 0.0
    %2045 = vmatpush1.msra.mxu0 0.0
    %2046 = vmatprep.subr.mxu0 0.0
    %2047 = vmatpush1.msra.mxu0 0.0
    %2048 = vmatprep.subr.mxu0 0.0
    %2049 = vmatpush1.msra.mxu0 0.0
    %2050 = vmatprep.subr.mxu0 0.0
    %2051 = vmatpush1.msra.mxu0 0.0
    %2052 = vmatprep.subr.mxu0 0.0
    %2053 = vmatpush1.msra.mxu0 0.0
    %2054 = vmatprep.subr.mxu0 0.0
    %2055 = vmatpush1.msra.mxu0 0.0
    %2056 = vmatprep.subr.mxu0 0.0
    %2057 = vmatpush1.msra.mxu0 0.0
    %2058 = vmatprep.subr.mxu0 0.0
    %2059 = vmatpush1.msra.mxu0 0.0
    %2060 = vmatprep.subr.mxu0 0.0
    %2061 = vmatpush1.msra.mxu0 0.0
    %2062 = vmatprep.subr.mxu0 0.0
    %2063 = vmatpush1.msra.mxu0 0.0
    %2064 = vmatprep.subr.mxu0 0.0
    %2065 = vmatpush1.msra.mxu0 0.0
    %2066 = vmatprep.subr.mxu0 0.0
    %2067 = vmatpush1.msra.mxu0 0.0
    %2068 = vmatprep.mubr.f32.mxu0 0.0
    %2069 = vmatmul.mubr.f32.gmra.mrb[0].mxu0 %v2002
    %v2070 = vpop.f32.mrb[0].mxu0
    %v2071 = vadd.f32 %v2000, %v2070
    %v2072 = vpop.f32.mrb[0].mxu0
    %2073 = vdwg.mxu0
    %vm2074 = vcmask 64512
    %2075 = vst.msk [vmem:[#allocation4] sm:$0xff] %vm2074, %v2071
    // Predicated region
    $region38: #{tpu_custom_call.1} parent=1 // pred_check
      _
    $region39: #{tpu_custom_call.1} parent=1 // pred_check_branch
      %2077 = sbr.rel (0) target = $region41
    $region40: #{tpu_custom_call.1} parent=1 // pred_region
      %s2079 = ssub.s32 128, 128
      %2080 = vsyncadd [#allocation5], %s2079
      %s2082 = sshll.u32 [#allocation4], 4
      %s2083 = int_to_ptr.vmem [resolvable:$true] %s2082
      %2085 = dma.vmem_to_hbm [thread:$0]  %s2083, 128, %s9, [#allocation5]
    $region41: #{tpu_custom_call.1} parent=1 // pred_fallthru
      _
    // Predicated region
    $region42: #{tpu_custom_call.1} parent=1 // pred_check
      _
    $region43: #{tpu_custom_call.1} parent=1 // pred_check_branch
      %2087 = sbr.rel (0) target = $region45
    $region44: #{tpu_custom_call.1} parent=1 // pred_region
      %s2089 = ssub.s32 256, 256
      %2090 = vsyncadd [#allocation7], %s2089
      %s2091 = sshll.u32 [#allocation6], 4
      %s2092 = int_to_ptr.vmem [resolvable:$true] %s2091
      %2097 = dma.vmem_to_hbm [thread:$0]  %s2092, 256, %s10, [#allocation7], 128, 128, 8
    $region45: #{tpu_custom_call.1} parent=1 // pred_fallthru
      _
    // Predicated region
    $region46: #{tpu_custom_call.1} parent=1 // pred_check
      _
    $region47: #{tpu_custom_call.1} parent=1 // pred_check_branch
      %2099 = sbr.rel (0) target = $region49
    $region48: #{tpu_custom_call.1} parent=1 // pred_region
      %2100 = dma.done [#allocation5], 128
    $region49: #{tpu_custom_call.1} parent=1 // pred_fallthru
      _
    // Predicated region
    $region50: #{tpu_custom_call.1} parent=1 // pred_check
      _
    $region51: #{tpu_custom_call.1} parent=1 // pred_check_branch
      %2102 = sbr.rel (0) target = $region53
    $region52: #{tpu_custom_call.1} parent=1 // pred_region
      %2103 = dma.done [#allocation7], 256
    $region53: #{tpu_custom_call.1} parent=1 // pred_fallthru
      _
    %2104 = vsyncpa [#allocation5], 1
    %2105 = vsyncpa [#allocation7], 1

</llo_original>
